<compile_context>
chip_gen: v5e
topology: v5e:2x2
jax: 0.10.0
libtpu: 0.0.40
codegen_flags: <defaults>
</compile_context>

<pallas_src>
import jax
import jax.numpy as jnp
from jax import lax
from jax.experimental import pallas as pl
from jax.experimental.pallas import tpu as pltpu

H = 32          # hidden size of l1 / both GRUs
G = 3 * H       # stacked r|z|n gate width (96)
F = 64          # width of the "final" MLP


def meta_solver_kernel(xcol_ref, w_ref, vec_ref, mlp_ref, out_ref):
    n = out_ref.shape[0]

    vec = vec_ref[...]                      # (8, G) constant row slab
    v1    = vec[0:1, :]                     # (1, G)  rank-1 folded l1_w @ W_ih1^T
    c1    = vec[1:2, :]                     # (1, G)  folded input-side consts (GRU1)
    c2    = vec[2:3, :]                     # (1, G)  folded input-side consts (GRU2)
    bhh1n = vec[3:4, 0:H]                   # (1, H)  n-gate hidden bias, GRU1
    bhh2n = vec[3:4, H:2 * H]               # (1, H)  n-gate hidden bias, GRU2
    bf1   = vec[4:5, 0:F]                   # (1, F)
    bf2   = vec[5:6, 0:F]                   # (1, F)
    wf3   = vec[6:7, 0:F]                   # (1, F)  final Linear(64,1) as a row
    bf3   = vec[7:8, 0:1]                   # (1, 1)

    whh1 = w_ref[0:H, :]                    # (H, G) fused r|z|n hidden weights, GRU1
    wih2 = w_ref[H:2 * H, :]                # (H, G) fused input weights, GRU2
    whh2 = w_ref[2 * H:3 * H, :]            # (H, G) fused hidden weights, GRU2

    wf1l = mlp_ref[0:H, :]                  # (H, F) first MLP layer, local half
    wf1g = mlp_ref[H:2 * H, :]              # (H, F) first MLP layer, global half
    wf2  = mlp_ref[2 * H:2 * H + F, :]      # (F, F)

    def dot(a, b):
        return jnp.dot(a, b, preferred_element_type=jnp.float32)

    def sigmoid(v):                         # exact: sigma(v) = 0.5*(1 + tanh(v/2))
        return 0.5 * jnp.tanh(0.5 * v) + 0.5

    def gru_step(gi, h, whh, bhhn):
        """One fused-gate GRU step.  gi: (k, G) input proj with folded biases."""
        if h is None:                       # t == 0: h0 == 0 -> skip h @ W_hh
            rz = sigmoid(gi[:, 0:2 * H])
            r, z = rz[:, 0:H], rz[:, H:2 * H]
            ng = jnp.tanh(gi[:, 2 * H:] + r * bhhn)
            return (1.0 - z) * ng
        gh = dot(h, whh)                    # single (k,H)@(H,G) MXU issue / step
        rz = sigmoid(gi[:, 0:2 * H] + gh[:, 0:2 * H])
        r, z = rz[:, 0:H], rz[:, H:2 * H]
        ng = jnp.tanh(gi[:, 2 * H:] + r * (gh[:, 2 * H:] + bhhn))
        return ng + z * (h - ng)            # == (1-z)*ng + z*h

    # ---- GRU1 over matrix columns (batch = matrix rows), fully unrolled ----
    # Hoisted input projection for every step, time-major (n*n, G): per-step
    # access below is a sublane-aligned static slice (free view).
    gi1 = xcol_ref[...] * v1 + c1           # (n*n, G) broadcast FMA at entry

    h1 = gru_step(gi1[0:n, :], None, whh1, bhh1n)
    for t in range(1, n):
        h1 = gru_step(gi1[t * n:(t + 1) * n, :], h1, whh1, bhh1n)   # (n, H)

    # ---- GRU2 over the row-hidden sequence (batch = 1), fully unrolled -----
    gi2 = dot(h1, wih2) + c2                # (n, G): one matmul for all steps

    h2 = gru_step(gi2[0:1, :], None, whh2, bhh2n)
    for t in range(1, n):
        h2 = gru_step(gi2[t:t + 1, :], h2, whh2, bhh2n)             # (1, H)

    # ---- final MLP + softmax (temperature = 1.0) ----------------------------
    gbias = dot(h2, wf1g) + bf1                                      # (1, F)
    a1 = jnp.maximum(dot(h1, wf1l) + gbias, 0.0)                     # (n, F)
    a2 = jnp.maximum(dot(a1, wf2) + bf2, 0.0)                        # (n, F)
    # (8,64)@(64,1) matmul replaced by VPU multiply + XLU lane reduction.
    logits = jnp.sum(a2 * wf3, axis=-1, keepdims=True) + bf3         # (n, 1)
    m = jnp.max(logits, axis=0, keepdims=True)
    e = jnp.exp(logits - m)
    out_ref[...] = e / jnp.sum(e, axis=0, keepdims=True)


def pack_params(params):
    """Fold / transpose / fuse the torch-layout parameters into 3 slabs (run once)."""
    (l1_w, l1_b, w_ih1, w_hh1, b_ih1, b_hh1,
     w_ih2, w_hh2, b_ih2, b_hh2, wf1, bf1, wf2, bf2, wf3, bf3) = params
    hp = lax.Precision.HIGHEST
    f32 = jnp.float32

    l1w = l1_w.astype(f32).reshape(1, H)          # Linear(1,32) weight as a row
    l1b = l1_b.astype(f32).reshape(1, H)

    # --- GRU1: rank-1 fold of Linear(1,32) into the fused input projection,
    #     plus folding b_hh r/z into the input-side constants.
    wih1_t = w_ih1.astype(f32).T                                   # (H, G) = [r|z|n]
    v1 = jnp.dot(l1w, wih1_t, precision=hp)                        # (1, G)
    c1 = (jnp.dot(l1b, wih1_t, precision=hp)
          + b_ih1.astype(f32).reshape(1, G)
          + jnp.concatenate([b_hh1[:2 * H].astype(f32),
                             jnp.zeros((H,), f32)]).reshape(1, G))
    bhh1n = b_hh1[2 * H:].astype(f32).reshape(1, H)

    # --- GRU2 (input = GRU1 hidden sequence), same bias folding.
    c2 = (b_ih2.astype(f32).reshape(1, G)
          + jnp.concatenate([b_hh2[:2 * H].astype(f32),
                             jnp.zeros((H,), f32)]).reshape(1, G))
    bhh2n = b_hh2[2 * H:].astype(f32).reshape(1, H)

    # --- slab 1: fused GRU weights (96, 96).
    w_slab = jnp.concatenate([w_hh1.astype(f32).T,
                              w_ih2.astype(f32).T,
                              w_hh2.astype(f32).T], axis=0)        # (3H, G)

    # --- slab 2: all row vectors / biases, padded to G lanes (8, 96).
    def pad_row(v):
        v = v.astype(f32).reshape(1, -1)
        return jnp.pad(v, ((0, 0), (0, G - v.shape[1])))

    vec_slab = jnp.concatenate([
        v1, c1, c2,
        jnp.concatenate([bhh1n, bhh2n, jnp.zeros((1, H), f32)], axis=1),
        pad_row(bf1),
        pad_row(bf2),
        pad_row(wf3.reshape(1, F)),
        pad_row(bf3.reshape(1, 1)),
    ], axis=0)                                                      # (8, G)

    # --- slab 3: MLP weights, first layer split local/global (no concat) (128, 64).
    mlp_slab = jnp.concatenate([wf1[:, 0:H].astype(f32).T,
                                wf1[:, H:2 * H].astype(f32).T,
                                wf2.astype(f32).T], axis=0)         # (2H+F, F)

    return (w_slab, vec_slab, mlp_slab)


def meta_solver_forward(x, packed):
    """x: (B0, B1, n, n) float32 — only x[0, 0] is used (as in the torch module)."""
    n = x.shape[-1]
    x2d = x[0, 0].astype(jnp.float32)
    # Time-major flattened column (layout plumbing only): xcol[t*n + b] = x[b, t].
    xcol = x2d.T.reshape(n * n, 1)
    w_slab, vec_slab, mlp_slab = packed

    flops = (2 * n * n * G                       # gi1 broadcast FMA
             + (n - 1) * 2 * n * H * G           # GRU1 recurrent matmuls
             + 2 * n * H * G                     # GRU2 input projection
             + (n - 1) * 2 * H * G               # GRU2 recurrent matmuls
             + 2 * n * H * F + 2 * H * F         # MLP layer 1 (local + global)
             + 2 * n * F * F + 2 * n * F)        # MLP layer 2 + final row-dot
    transc = n * n * G + n * G + n               # tanh (gates) + softmax exp
    bytes_acc = 4 * (n * n + 3 * H * G + 8 * G + (2 * H + F) * F + n)
    cost = pl.CostEstimate(flops=flops, transcendentals=transc,
                           bytes_accessed=bytes_acc)

    out = pl.pallas_call(
        meta_solver_kernel,
        out_shape=jax.ShapeDtypeStruct((n, 1), jnp.float32),
        in_specs=[pl.BlockSpec(memory_space=pltpu.MemorySpace.VMEM)] * 4,
        out_specs=pl.BlockSpec(memory_space=pltpu.MemorySpace.VMEM),
        cost_estimate=cost,
    )(xcol, w_slab, vec_slab, mlp_slab)
    return out[:, 0][None, :]      # (1, n), matches torch softmax output


def init_params(key):
    ks = jax.random.split(key, 16)

    def u(k, shape, scale):
        return jax.random.uniform(k, shape, jnp.float32, -scale, scale)

    s1 = 1.0
    sh = 1.0 / float(jnp.sqrt(32.0))
    s64 = 1.0 / float(jnp.sqrt(64.0))
    l1_w = u(ks[0], (H, 1), s1);  l1_b = u(ks[1], (H,), s1)
    w_ih1 = u(ks[2], (G, H), sh); w_hh1 = u(ks[3], (G, H), sh)
    b_ih1 = u(ks[4], (G,), sh);   b_hh1 = u(ks[5], (G,), sh)
    w_ih2 = u(ks[6], (G, H), sh); w_hh2 = u(ks[7], (G, H), sh)
    b_ih2 = u(ks[8], (G,), sh);   b_hh2 = u(ks[9], (G,), sh)
    wf1 = u(ks[10], (F, 2 * H), s64); bf1 = u(ks[11], (F,), s64)
    wf2 = u(ks[12], (F, F), s64);     bf2 = u(ks[13], (F,), s64)
    wf3 = u(ks[14], (1, F), s64);     bf3 = u(ks[15], (1,), s64)
    return (l1_w, l1_b, w_ih1, w_hh1, b_ih1, b_hh1,
            w_ih2, w_hh2, b_ih2, b_hh2, wf1, bf1, wf2, bf2, wf3, bf3)


def reference_forward(x, params):
    """Pure-JAX re-implementation of the torch forward (for verification)."""
    (l1_w, l1_b, w_ih1, w_hh1, b_ih1, b_hh1,
     w_ih2, w_hh2, b_ih2, b_hh2, wf1, bf1, wf2, bf2, wf3, bf3) = params
    hp = lax.Precision.HIGHEST
    x0 = x[0]
    n = x0.shape[-1]
    x1 = (x0[..., None] * l1_w[:, 0] + l1_b)[0]      # (n, n, H)

    def gru(x_seq, w_ih, w_hh, b_ih, b_hh):
        h = jnp.zeros((x_seq.shape[0], H), jnp.float32)
        for t in range(x_seq.shape[1]):
            xt = x_seq[:, t, :]
            gi = jnp.dot(xt, w_ih.T, precision=hp) + b_ih
            gh = jnp.dot(h, w_hh.T, precision=hp) + b_hh
            r = jax.nn.sigmoid(gi[:, :H] + gh[:, :H])
            z = jax.nn.sigmoid(gi[:, H:2 * H] + gh[:, H:2 * H])
            ng = jnp.tanh(gi[:, 2 * H:] + r * gh[:, 2 * H:])
            h = (1.0 - z) * ng + z * h
        return h

    h1 = gru(x1, w_ih1, w_hh1, b_ih1, b_hh1)                    # (n, H)
    h2 = gru(h1[None, :, :], w_ih2, w_hh2, b_ih2, b_hh2)        # (1, H)
    xf = jnp.concatenate([h1, jnp.broadcast_to(h2, (n, H))], axis=-1)
    a1 = jax.nn.relu(jnp.dot(xf, wf1.T, precision=hp) + bf1)
    a2 = jax.nn.relu(jnp.dot(a1, wf2.T, precision=hp) + bf2)
    logits = (jnp.dot(a2, wf3.T, precision=hp) + bf3)[:, 0]
    return jax.nn.softmax(logits / 1.0)[None, :]


if __name__ == "__main__":
    key = jax.random.PRNGKey(0)
    k_x, k_p = jax.random.split(key)
    n = 8
    # forward() requires the last two dims to be equal (n x n); only x[0,0] is used.
    x = jax.random.normal(k_x, (2, 3, n, n), jnp.float32)
    params = init_params(k_p)

    packed = jax.block_until_ready(pack_params(params))   # hoisted: packed once
    fwd = jax.jit(meta_solver_forward)
    out = jax.block_until_ready(fwd(x, packed))

    ref = reference_forward(x, params)
    assert out.shape == (1, n), out.shape
    assert jnp.allclose(out, ref, rtol=2e-3, atol=2e-4), (out, ref)
    print("KERNEL_OK")
</pallas_src>

<mosaic_0001>
module attributes {stable_mosaic.version = 11 : i64} {
  func.func @meta_solver_kernel(%arg0: memref<64x1xf32, #tpu.memory_space<vmem>>, %arg1: memref<96x96xf32, #tpu.memory_space<vmem>>, %arg2: memref<8x96xf32, #tpu.memory_space<vmem>>, %arg3: memref<128x64xf32, #tpu.memory_space<vmem>>, %arg4: memref<8x1xf32, #tpu.memory_space<vmem>>) attributes {dimension_semantics = [], scalar_prefetch = 0 : i64, scratch_operands = 0 : i64, tpu.core_type = #tpu.core_type<tc>} {
    %c0 = arith.constant 0 : index
    %c0_0 = arith.constant 0 : index
    %0 = vector.load %arg2[%c0, %c0_0] : memref<8x96xf32, #tpu.memory_space<vmem>>, vector<8x96xf32>
    %1 = vector.extract_strided_slice %0 {offsets = [0, 0], sizes = [1, 96], strides = [1, 1]} : vector<8x96xf32> to vector<1x96xf32>
    %2 = vector.extract_strided_slice %0 {offsets = [1, 0], sizes = [1, 96], strides = [1, 1]} : vector<8x96xf32> to vector<1x96xf32>
    %3 = vector.extract_strided_slice %0 {offsets = [2, 0], sizes = [1, 96], strides = [1, 1]} : vector<8x96xf32> to vector<1x96xf32>
    %4 = vector.extract_strided_slice %0 {offsets = [3, 0], sizes = [1, 32], strides = [1, 1]} : vector<8x96xf32> to vector<1x32xf32>
    %5 = vector.extract_strided_slice %0 {offsets = [3, 32], sizes = [1, 32], strides = [1, 1]} : vector<8x96xf32> to vector<1x32xf32>
    %6 = vector.extract_strided_slice %0 {offsets = [4, 0], sizes = [1, 64], strides = [1, 1]} : vector<8x96xf32> to vector<1x64xf32>
    %7 = vector.extract_strided_slice %0 {offsets = [5, 0], sizes = [1, 64], strides = [1, 1]} : vector<8x96xf32> to vector<1x64xf32>
    %8 = vector.extract_strided_slice %0 {offsets = [6, 0], sizes = [1, 64], strides = [1, 1]} : vector<8x96xf32> to vector<1x64xf32>
    %9 = vector.extract_strided_slice %0 {offsets = [7, 0], sizes = [1, 1], strides = [1, 1]} : vector<8x96xf32> to vector<1x1xf32>
    %c0_1 = arith.constant 0 : index
    %c0_2 = arith.constant 0 : index
    %10 = vector.load %arg1[%c0_1, %c0_2] : memref<96x96xf32, #tpu.memory_space<vmem>>, vector<32x96xf32>
    %c32 = arith.constant 32 : index
    %c0_3 = arith.constant 0 : index
    %11 = vector.load %arg1[%c32, %c0_3] : memref<96x96xf32, #tpu.memory_space<vmem>>, vector<32x96xf32>
    %c64 = arith.constant 64 : index
    %c0_4 = arith.constant 0 : index
    %12 = vector.load %arg1[%c64, %c0_4] : memref<96x96xf32, #tpu.memory_space<vmem>>, vector<32x96xf32>
    %c0_5 = arith.constant 0 : index
    %c0_6 = arith.constant 0 : index
    %13 = vector.load %arg3[%c0_5, %c0_6] : memref<128x64xf32, #tpu.memory_space<vmem>>, vector<32x64xf32>
    %c32_7 = arith.constant 32 : index
    %c0_8 = arith.constant 0 : index
    %14 = vector.load %arg3[%c32_7, %c0_8] : memref<128x64xf32, #tpu.memory_space<vmem>>, vector<32x64xf32>
    %c64_9 = arith.constant 64 : index
    %c0_10 = arith.constant 0 : index
    %15 = vector.load %arg3[%c64_9, %c0_10] : memref<128x64xf32, #tpu.memory_space<vmem>>, vector<64x64xf32>
    %c0_11 = arith.constant 0 : index
    %c0_12 = arith.constant 0 : index
    %16 = vector.load %arg0[%c0_11, %c0_12] : memref<64x1xf32, #tpu.memory_space<vmem>>, vector<64x1xf32>
    %17 = vector.broadcast %16 : vector<64x1xf32> to vector<64x96xf32>
    %18 = vector.broadcast %1 : vector<1x96xf32> to vector<64x96xf32>
    %19 = arith.mulf %17, %18 : vector<64x96xf32>
    %20 = vector.broadcast %2 : vector<1x96xf32> to vector<64x96xf32>
    %21 = arith.addf %19, %20 : vector<64x96xf32>
    %22 = vector.extract_strided_slice %21 {offsets = [0, 0], sizes = [8, 96], strides = [1, 1]} : vector<64x96xf32> to vector<8x96xf32>
    %23 = vector.extract_strided_slice %22 {offsets = [0, 0], sizes = [8, 64], strides = [1, 1]} : vector<8x96xf32> to vector<8x64xf32>
    %cst = arith.constant 5.000000e-01 : f32
    %24 = vector.broadcast %cst : f32 to vector<8x64xf32>
    %25 = arith.mulf %24, %23 : vector<8x64xf32>
    %26 = math.tanh %25 : vector<8x64xf32>
    %cst_13 = arith.constant 5.000000e-01 : f32
    %27 = vector.broadcast %cst_13 : f32 to vector<8x64xf32>
    %28 = arith.mulf %27, %26 : vector<8x64xf32>
    %cst_14 = arith.constant 5.000000e-01 : f32
    %29 = vector.broadcast %cst_14 : f32 to vector<8x64xf32>
    %30 = arith.addf %28, %29 : vector<8x64xf32>
    %31 = vector.extract_strided_slice %30 {offsets = [0, 0], sizes = [8, 32], strides = [1, 1]} : vector<8x64xf32> to vector<8x32xf32>
    %32 = vector.extract_strided_slice %30 {offsets = [0, 32], sizes = [8, 32], strides = [1, 1]} : vector<8x64xf32> to vector<8x32xf32>
    %33 = vector.extract_strided_slice %22 {offsets = [0, 64], sizes = [8, 32], strides = [1, 1]} : vector<8x96xf32> to vector<8x32xf32>
    %34 = vector.broadcast %4 : vector<1x32xf32> to vector<8x32xf32>
    %35 = arith.mulf %31, %34 : vector<8x32xf32>
    %36 = arith.addf %33, %35 : vector<8x32xf32>
    %37 = math.tanh %36 : vector<8x32xf32>
    %cst_15 = arith.constant 1.000000e+00 : f32
    %38 = vector.broadcast %cst_15 : f32 to vector<8x32xf32>
    %39 = arith.subf %38, %32 : vector<8x32xf32>
    %40 = arith.mulf %39, %37 : vector<8x32xf32>
    %41 = vector.extract_strided_slice %21 {offsets = [8, 0], sizes = [8, 96], strides = [1, 1]} : vector<64x96xf32> to vector<8x96xf32>
    %cst_16 = arith.constant dense<0.000000e+00> : vector<8x96xf32>
    %42 = tpu.matmul %40, %10, %cst_16 {dimension_numbers = #tpu.dot_dimension_numbers<[1], [0], [0], [1], [0, 0, 1, 1], [], []>} : vector<8x32xf32>, vector<32x96xf32>, vector<8x96xf32> -> vector<8x96xf32>
    %43 = vector.extract_strided_slice %41 {offsets = [0, 0], sizes = [8, 64], strides = [1, 1]} : vector<8x96xf32> to vector<8x64xf32>
    %44 = vector.extract_strided_slice %42 {offsets = [0, 0], sizes = [8, 64], strides = [1, 1]} : vector<8x96xf32> to vector<8x64xf32>
    %45 = arith.addf %43, %44 : vector<8x64xf32>
    %cst_17 = arith.constant 5.000000e-01 : f32
    %46 = vector.broadcast %cst_17 : f32 to vector<8x64xf32>
    %47 = arith.mulf %46, %45 : vector<8x64xf32>
    %48 = math.tanh %47 : vector<8x64xf32>
    %cst_18 = arith.constant 5.000000e-01 : f32
    %49 = vector.broadcast %cst_18 : f32 to vector<8x64xf32>
    %50 = arith.mulf %49, %48 : vector<8x64xf32>
    %cst_19 = arith.constant 5.000000e-01 : f32
    %51 = vector.broadcast %cst_19 : f32 to vector<8x64xf32>
    %52 = arith.addf %50, %51 : vector<8x64xf32>
    %53 = vector.extract_strided_slice %52 {offsets = [0, 0], sizes = [8, 32], strides = [1, 1]} : vector<8x64xf32> to vector<8x32xf32>
    %54 = vector.extract_strided_slice %52 {offsets = [0, 32], sizes = [8, 32], strides = [1, 1]} : vector<8x64xf32> to vector<8x32xf32>
    %55 = vector.extract_strided_slice %41 {offsets = [0, 64], sizes = [8, 32], strides = [1, 1]} : vector<8x96xf32> to vector<8x32xf32>
    %56 = vector.extract_strided_slice %42 {offsets = [0, 64], sizes = [8, 32], strides = [1, 1]} : vector<8x96xf32> to vector<8x32xf32>
    %57 = vector.broadcast %4 : vector<1x32xf32> to vector<8x32xf32>
    %58 = arith.addf %56, %57 : vector<8x32xf32>
    %59 = arith.mulf %53, %58 : vector<8x32xf32>
    %60 = arith.addf %55, %59 : vector<8x32xf32>
    %61 = math.tanh %60 : vector<8x32xf32>
    %62 = arith.subf %40, %61 : vector<8x32xf32>
    %63 = arith.mulf %54, %62 : vector<8x32xf32>
    %64 = arith.addf %61, %63 : vector<8x32xf32>
    %65 = vector.extract_strided_slice %21 {offsets = [16, 0], sizes = [8, 96], strides = [1, 1]} : vector<64x96xf32> to vector<8x96xf32>
    %cst_20 = arith.constant dense<0.000000e+00> : vector<8x96xf32>
    %66 = tpu.matmul %64, %10, %cst_20 {dimension_numbers = #tpu.dot_dimension_numbers<[1], [0], [0], [1], [0, 0, 1, 1], [], []>} : vector<8x32xf32>, vector<32x96xf32>, vector<8x96xf32> -> vector<8x96xf32>
    %67 = vector.extract_strided_slice %65 {offsets = [0, 0], sizes = [8, 64], strides = [1, 1]} : vector<8x96xf32> to vector<8x64xf32>
    %68 = vector.extract_strided_slice %66 {offsets = [0, 0], sizes = [8, 64], strides = [1, 1]} : vector<8x96xf32> to vector<8x64xf32>
    %69 = arith.addf %67, %68 : vector<8x64xf32>
    %cst_21 = arith.constant 5.000000e-01 : f32
    %70 = vector.broadcast %cst_21 : f32 to vector<8x64xf32>
    %71 = arith.mulf %70, %69 : vector<8x64xf32>
    %72 = math.tanh %71 : vector<8x64xf32>
    %cst_22 = arith.constant 5.000000e-01 : f32
    %73 = vector.broadcast %cst_22 : f32 to vector<8x64xf32>
    %74 = arith.mulf %73, %72 : vector<8x64xf32>
    %cst_23 = arith.constant 5.000000e-01 : f32
    %75 = vector.broadcast %cst_23 : f32 to vector<8x64xf32>
    %76 = arith.addf %74, %75 : vector<8x64xf32>
    %77 = vector.extract_strided_slice %76 {offsets = [0, 0], sizes = [8, 32], strides = [1, 1]} : vector<8x64xf32> to vector<8x32xf32>
    %78 = vector.extract_strided_slice %76 {offsets = [0, 32], sizes = [8, 32], strides = [1, 1]} : vector<8x64xf32> to vector<8x32xf32>
    %79 = vector.extract_strided_slice %65 {offsets = [0, 64], sizes = [8, 32], strides = [1, 1]} : vector<8x96xf32> to vector<8x32xf32>
    %80 = vector.extract_strided_slice %66 {offsets = [0, 64], sizes = [8, 32], strides = [1, 1]} : vector<8x96xf32> to vector<8x32xf32>
    %81 = vector.broadcast %4 : vector<1x32xf32> to vector<8x32xf32>
    %82 = arith.addf %80, %81 : vector<8x32xf32>
    %83 = arith.mulf %77, %82 : vector<8x32xf32>
    %84 = arith.addf %79, %83 : vector<8x32xf32>
    %85 = math.tanh %84 : vector<8x32xf32>
    %86 = arith.subf %64, %85 : vector<8x32xf32>
    %87 = arith.mulf %78, %86 : vector<8x32xf32>
    %88 = arith.addf %85, %87 : vector<8x32xf32>
    %89 = vector.extract_strided_slice %21 {offsets = [24, 0], sizes = [8, 96], strides = [1, 1]} : vector<64x96xf32> to vector<8x96xf32>
    %cst_24 = arith.constant dense<0.000000e+00> : vector<8x96xf32>
    %90 = tpu.matmul %88, %10, %cst_24 {dimension_numbers = #tpu.dot_dimension_numbers<[1], [0], [0], [1], [0, 0, 1, 1], [], []>} : vector<8x32xf32>, vector<32x96xf32>, vector<8x96xf32> -> vector<8x96xf32>
    %91 = vector.extract_strided_slice %89 {offsets = [0, 0], sizes = [8, 64], strides = [1, 1]} : vector<8x96xf32> to vector<8x64xf32>
    %92 = vector.extract_strided_slice %90 {offsets = [0, 0], sizes = [8, 64], strides = [1, 1]} : vector<8x96xf32> to vector<8x64xf32>
    %93 = arith.addf %91, %92 : vector<8x64xf32>
    %cst_25 = arith.constant 5.000000e-01 : f32
    %94 = vector.broadcast %cst_25 : f32 to vector<8x64xf32>
    %95 = arith.mulf %94, %93 : vector<8x64xf32>
    %96 = math.tanh %95 : vector<8x64xf32>
    %cst_26 = arith.constant 5.000000e-01 : f32
    %97 = vector.broadcast %cst_26 : f32 to vector<8x64xf32>
    %98 = arith.mulf %97, %96 : vector<8x64xf32>
    %cst_27 = arith.constant 5.000000e-01 : f32
    %99 = vector.broadcast %cst_27 : f32 to vector<8x64xf32>
    %100 = arith.addf %98, %99 : vector<8x64xf32>
    %101 = vector.extract_strided_slice %100 {offsets = [0, 0], sizes = [8, 32], strides = [1, 1]} : vector<8x64xf32> to vector<8x32xf32>
    %102 = vector.extract_strided_slice %100 {offsets = [0, 32], sizes = [8, 32], strides = [1, 1]} : vector<8x64xf32> to vector<8x32xf32>
    %103 = vector.extract_strided_slice %89 {offsets = [0, 64], sizes = [8, 32], strides = [1, 1]} : vector<8x96xf32> to vector<8x32xf32>
    %104 = vector.extract_strided_slice %90 {offsets = [0, 64], sizes = [8, 32], strides = [1, 1]} : vector<8x96xf32> to vector<8x32xf32>
    %105 = vector.broadcast %4 : vector<1x32xf32> to vector<8x32xf32>
    %106 = arith.addf %104, %105 : vector<8x32xf32>
    %107 = arith.mulf %101, %106 : vector<8x32xf32>
    %108 = arith.addf %103, %107 : vector<8x32xf32>
    %109 = math.tanh %108 : vector<8x32xf32>
    %110 = arith.subf %88, %109 : vector<8x32xf32>
    %111 = arith.mulf %102, %110 : vector<8x32xf32>
    %112 = arith.addf %109, %111 : vector<8x32xf32>
    %113 = vector.extract_strided_slice %21 {offsets = [32, 0], sizes = [8, 96], strides = [1, 1]} : vector<64x96xf32> to vector<8x96xf32>
    %cst_28 = arith.constant dense<0.000000e+00> : vector<8x96xf32>
    %114 = tpu.matmul %112, %10, %cst_28 {dimension_numbers = #tpu.dot_dimension_numbers<[1], [0], [0], [1], [0, 0, 1, 1], [], []>} : vector<8x32xf32>, vector<32x96xf32>, vector<8x96xf32> -> vector<8x96xf32>
    %115 = vector.extract_strided_slice %113 {offsets = [0, 0], sizes = [8, 64], strides = [1, 1]} : vector<8x96xf32> to vector<8x64xf32>
    %116 = vector.extract_strided_slice %114 {offsets = [0, 0], sizes = [8, 64], strides = [1, 1]} : vector<8x96xf32> to vector<8x64xf32>
    %117 = arith.addf %115, %116 : vector<8x64xf32>
    %cst_29 = arith.constant 5.000000e-01 : f32
    %118 = vector.broadcast %cst_29 : f32 to vector<8x64xf32>
    %119 = arith.mulf %118, %117 : vector<8x64xf32>
    %120 = math.tanh %119 : vector<8x64xf32>
    %cst_30 = arith.constant 5.000000e-01 : f32
    %121 = vector.broadcast %cst_30 : f32 to vector<8x64xf32>
    %122 = arith.mulf %121, %120 : vector<8x64xf32>
    %cst_31 = arith.constant 5.000000e-01 : f32
    %123 = vector.broadcast %cst_31 : f32 to vector<8x64xf32>
    %124 = arith.addf %122, %123 : vector<8x64xf32>
    %125 = vector.extract_strided_slice %124 {offsets = [0, 0], sizes = [8, 32], strides = [1, 1]} : vector<8x64xf32> to vector<8x32xf32>
    %126 = vector.extract_strided_slice %124 {offsets = [0, 32], sizes = [8, 32], strides = [1, 1]} : vector<8x64xf32> to vector<8x32xf32>
    %127 = vector.extract_strided_slice %113 {offsets = [0, 64], sizes = [8, 32], strides = [1, 1]} : vector<8x96xf32> to vector<8x32xf32>
    %128 = vector.extract_strided_slice %114 {offsets = [0, 64], sizes = [8, 32], strides = [1, 1]} : vector<8x96xf32> to vector<8x32xf32>
    %129 = vector.broadcast %4 : vector<1x32xf32> to vector<8x32xf32>
    %130 = arith.addf %128, %129 : vector<8x32xf32>
    %131 = arith.mulf %125, %130 : vector<8x32xf32>
    %132 = arith.addf %127, %131 : vector<8x32xf32>
    %133 = math.tanh %132 : vector<8x32xf32>
    %134 = arith.subf %112, %133 : vector<8x32xf32>
    %135 = arith.mulf %126, %134 : vector<8x32xf32>
    %136 = arith.addf %133, %135 : vector<8x32xf32>
    %137 = vector.extract_strided_slice %21 {offsets = [40, 0], sizes = [8, 96], strides = [1, 1]} : vector<64x96xf32> to vector<8x96xf32>
    %cst_32 = arith.constant dense<0.000000e+00> : vector<8x96xf32>
    %138 = tpu.matmul %136, %10, %cst_32 {dimension_numbers = #tpu.dot_dimension_numbers<[1], [0], [0], [1], [0, 0, 1, 1], [], []>} : vector<8x32xf32>, vector<32x96xf32>, vector<8x96xf32> -> vector<8x96xf32>
    %139 = vector.extract_strided_slice %137 {offsets = [0, 0], sizes = [8, 64], strides = [1, 1]} : vector<8x96xf32> to vector<8x64xf32>
    %140 = vector.extract_strided_slice %138 {offsets = [0, 0], sizes = [8, 64], strides = [1, 1]} : vector<8x96xf32> to vector<8x64xf32>
    %141 = arith.addf %139, %140 : vector<8x64xf32>
    %cst_33 = arith.constant 5.000000e-01 : f32
    %142 = vector.broadcast %cst_33 : f32 to vector<8x64xf32>
    %143 = arith.mulf %142, %141 : vector<8x64xf32>
    %144 = math.tanh %143 : vector<8x64xf32>
    %cst_34 = arith.constant 5.000000e-01 : f32
    %145 = vector.broadcast %cst_34 : f32 to vector<8x64xf32>
    %146 = arith.mulf %145, %144 : vector<8x64xf32>
    %cst_35 = arith.constant 5.000000e-01 : f32
    %147 = vector.broadcast %cst_35 : f32 to vector<8x64xf32>
    %148 = arith.addf %146, %147 : vector<8x64xf32>
    %149 = vector.extract_strided_slice %148 {offsets = [0, 0], sizes = [8, 32], strides = [1, 1]} : vector<8x64xf32> to vector<8x32xf32>
    %150 = vector.extract_strided_slice %148 {offsets = [0, 32], sizes = [8, 32], strides = [1, 1]} : vector<8x64xf32> to vector<8x32xf32>
    %151 = vector.extract_strided_slice %137 {offsets = [0, 64], sizes = [8, 32], strides = [1, 1]} : vector<8x96xf32> to vector<8x32xf32>
    %152 = vector.extract_strided_slice %138 {offsets = [0, 64], sizes = [8, 32], strides = [1, 1]} : vector<8x96xf32> to vector<8x32xf32>
    %153 = vector.broadcast %4 : vector<1x32xf32> to vector<8x32xf32>
    %154 = arith.addf %152, %153 : vector<8x32xf32>
    %155 = arith.mulf %149, %154 : vector<8x32xf32>
    %156 = arith.addf %151, %155 : vector<8x32xf32>
    %157 = math.tanh %156 : vector<8x32xf32>
    %158 = arith.subf %136, %157 : vector<8x32xf32>
    %159 = arith.mulf %150, %158 : vector<8x32xf32>
    %160 = arith.addf %157, %159 : vector<8x32xf32>
    %161 = vector.extract_strided_slice %21 {offsets = [48, 0], sizes = [8, 96], strides = [1, 1]} : vector<64x96xf32> to vector<8x96xf32>
    %cst_36 = arith.constant dense<0.000000e+00> : vector<8x96xf32>
    %162 = tpu.matmul %160, %10, %cst_36 {dimension_numbers = #tpu.dot_dimension_numbers<[1], [0], [0], [1], [0, 0, 1, 1], [], []>} : vector<8x32xf32>, vector<32x96xf32>, vector<8x96xf32> -> vector<8x96xf32>
    %163 = vector.extract_strided_slice %161 {offsets = [0, 0], sizes = [8, 64], strides = [1, 1]} : vector<8x96xf32> to vector<8x64xf32>
    %164 = vector.extract_strided_slice %162 {offsets = [0, 0], sizes = [8, 64], strides = [1, 1]} : vector<8x96xf32> to vector<8x64xf32>
    %165 = arith.addf %163, %164 : vector<8x64xf32>
    %cst_37 = arith.constant 5.000000e-01 : f32
    %166 = vector.broadcast %cst_37 : f32 to vector<8x64xf32>
    %167 = arith.mulf %166, %165 : vector<8x64xf32>
    %168 = math.tanh %167 : vector<8x64xf32>
    %cst_38 = arith.constant 5.000000e-01 : f32
    %169 = vector.broadcast %cst_38 : f32 to vector<8x64xf32>
    %170 = arith.mulf %169, %168 : vector<8x64xf32>
    %cst_39 = arith.constant 5.000000e-01 : f32
    %171 = vector.broadcast %cst_39 : f32 to vector<8x64xf32>
    %172 = arith.addf %170, %171 : vector<8x64xf32>
    %173 = vector.extract_strided_slice %172 {offsets = [0, 0], sizes = [8, 32], strides = [1, 1]} : vector<8x64xf32> to vector<8x32xf32>
    %174 = vector.extract_strided_slice %172 {offsets = [0, 32], sizes = [8, 32], strides = [1, 1]} : vector<8x64xf32> to vector<8x32xf32>
    %175 = vector.extract_strided_slice %161 {offsets = [0, 64], sizes = [8, 32], strides = [1, 1]} : vector<8x96xf32> to vector<8x32xf32>
    %176 = vector.extract_strided_slice %162 {offsets = [0, 64], sizes = [8, 32], strides = [1, 1]} : vector<8x96xf32> to vector<8x32xf32>
    %177 = vector.broadcast %4 : vector<1x32xf32> to vector<8x32xf32>
    %178 = arith.addf %176, %177 : vector<8x32xf32>
    %179 = arith.mulf %173, %178 : vector<8x32xf32>
    %180 = arith.addf %175, %179 : vector<8x32xf32>
    %181 = math.tanh %180 : vector<8x32xf32>
    %182 = arith.subf %160, %181 : vector<8x32xf32>
    %183 = arith.mulf %174, %182 : vector<8x32xf32>
    %184 = arith.addf %181, %183 : vector<8x32xf32>
    %185 = vector.extract_strided_slice %21 {offsets = [56, 0], sizes = [8, 96], strides = [1, 1]} : vector<64x96xf32> to vector<8x96xf32>
    %cst_40 = arith.constant dense<0.000000e+00> : vector<8x96xf32>
    %186 = tpu.matmul %184, %10, %cst_40 {dimension_numbers = #tpu.dot_dimension_numbers<[1], [0], [0], [1], [0, 0, 1, 1], [], []>} : vector<8x32xf32>, vector<32x96xf32>, vector<8x96xf32> -> vector<8x96xf32>
    %187 = vector.extract_strided_slice %185 {offsets = [0, 0], sizes = [8, 64], strides = [1, 1]} : vector<8x96xf32> to vector<8x64xf32>
    %188 = vector.extract_strided_slice %186 {offsets = [0, 0], sizes = [8, 64], strides = [1, 1]} : vector<8x96xf32> to vector<8x64xf32>
    %189 = arith.addf %187, %188 : vector<8x64xf32>
    %cst_41 = arith.constant 5.000000e-01 : f32
    %190 = vector.broadcast %cst_41 : f32 to vector<8x64xf32>
    %191 = arith.mulf %190, %189 : vector<8x64xf32>
    %192 = math.tanh %191 : vector<8x64xf32>
    %cst_42 = arith.constant 5.000000e-01 : f32
    %193 = vector.broadcast %cst_42 : f32 to vector<8x64xf32>
    %194 = arith.mulf %193, %192 : vector<8x64xf32>
    %cst_43 = arith.constant 5.000000e-01 : f32
    %195 = vector.broadcast %cst_43 : f32 to vector<8x64xf32>
    %196 = arith.addf %194, %195 : vector<8x64xf32>
    %197 = vector.extract_strided_slice %196 {offsets = [0, 0], sizes = [8, 32], strides = [1, 1]} : vector<8x64xf32> to vector<8x32xf32>
    %198 = vector.extract_strided_slice %196 {offsets = [0, 32], sizes = [8, 32], strides = [1, 1]} : vector<8x64xf32> to vector<8x32xf32>
    %199 = vector.extract_strided_slice %185 {offsets = [0, 64], sizes = [8, 32], strides = [1, 1]} : vector<8x96xf32> to vector<8x32xf32>
    %200 = vector.extract_strided_slice %186 {offsets = [0, 64], sizes = [8, 32], strides = [1, 1]} : vector<8x96xf32> to vector<8x32xf32>
    %201 = vector.broadcast %4 : vector<1x32xf32> to vector<8x32xf32>
    %202 = arith.addf %200, %201 : vector<8x32xf32>
    %203 = arith.mulf %197, %202 : vector<8x32xf32>
    %204 = arith.addf %199, %203 : vector<8x32xf32>
    %205 = math.tanh %204 : vector<8x32xf32>
    %206 = arith.subf %184, %205 : vector<8x32xf32>
    %207 = arith.mulf %198, %206 : vector<8x32xf32>
    %208 = arith.addf %205, %207 : vector<8x32xf32>
    %cst_44 = arith.constant dense<0.000000e+00> : vector<8x96xf32>
    %209 = tpu.matmul %208, %11, %cst_44 {dimension_numbers = #tpu.dot_dimension_numbers<[1], [0], [0], [1], [0, 0, 1, 1], [], []>} : vector<8x32xf32>, vector<32x96xf32>, vector<8x96xf32> -> vector<8x96xf32>
    %210 = vector.broadcast %3 : vector<1x96xf32> to vector<8x96xf32>
    %211 = arith.addf %209, %210 : vector<8x96xf32>
    %212 = vector.extract_strided_slice %211 {offsets = [0, 0], sizes = [1, 96], strides = [1, 1]} : vector<8x96xf32> to vector<1x96xf32>
    %213 = vector.extract_strided_slice %212 {offsets = [0, 0], sizes = [1, 64], strides = [1, 1]} : vector<1x96xf32> to vector<1x64xf32>
    %cst_45 = arith.constant 5.000000e-01 : f32
    %214 = vector.broadcast %cst_45 : f32 to vector<1x64xf32>
    %215 = arith.mulf %214, %213 : vector<1x64xf32>
    %216 = math.tanh %215 : vector<1x64xf32>
    %cst_46 = arith.constant 5.000000e-01 : f32
    %217 = vector.broadcast %cst_46 : f32 to vector<1x64xf32>
    %218 = arith.mulf %217, %216 : vector<1x64xf32>
    %cst_47 = arith.constant 5.000000e-01 : f32
    %219 = vector.broadcast %cst_47 : f32 to vector<1x64xf32>
    %220 = arith.addf %218, %219 : vector<1x64xf32>
    %221 = vector.extract_strided_slice %220 {offsets = [0, 0], sizes = [1, 32], strides = [1, 1]} : vector<1x64xf32> to vector<1x32xf32>
    %222 = vector.extract_strided_slice %220 {offsets = [0, 32], sizes = [1, 32], strides = [1, 1]} : vector<1x64xf32> to vector<1x32xf32>
    %223 = vector.extract_strided_slice %212 {offsets = [0, 64], sizes = [1, 32], strides = [1, 1]} : vector<1x96xf32> to vector<1x32xf32>
    %224 = arith.mulf %221, %5 : vector<1x32xf32>
    %225 = arith.addf %223, %224 : vector<1x32xf32>
    %226 = math.tanh %225 : vector<1x32xf32>
    %cst_48 = arith.constant 1.000000e+00 : f32
    %227 = vector.broadcast %cst_48 : f32 to vector<1x32xf32>
    %228 = arith.subf %227, %222 : vector<1x32xf32>
    %229 = arith.mulf %228, %226 : vector<1x32xf32>
    %230 = vector.extract_strided_slice %211 {offsets = [1, 0], sizes = [1, 96], strides = [1, 1]} : vector<8x96xf32> to vector<1x96xf32>
    %cst_49 = arith.constant dense<0.000000e+00> : vector<1x96xf32>
    %231 = tpu.matmul %229, %12, %cst_49 {dimension_numbers = #tpu.dot_dimension_numbers<[1], [0], [0], [1], [0, 0, 1, 1], [], []>} : vector<1x32xf32>, vector<32x96xf32>, vector<1x96xf32> -> vector<1x96xf32>
    %232 = vector.extract_strided_slice %230 {offsets = [0, 0], sizes = [1, 64], strides = [1, 1]} : vector<1x96xf32> to vector<1x64xf32>
    %233 = vector.extract_strided_slice %231 {offsets = [0, 0], sizes = [1, 64], strides = [1, 1]} : vector<1x96xf32> to vector<1x64xf32>
    %234 = arith.addf %232, %233 : vector<1x64xf32>
    %cst_50 = arith.constant 5.000000e-01 : f32
    %235 = vector.broadcast %cst_50 : f32 to vector<1x64xf32>
    %236 = arith.mulf %235, %234 : vector<1x64xf32>
    %237 = math.tanh %236 : vector<1x64xf32>
    %cst_51 = arith.constant 5.000000e-01 : f32
    %238 = vector.broadcast %cst_51 : f32 to vector<1x64xf32>
    %239 = arith.mulf %238, %237 : vector<1x64xf32>
    %cst_52 = arith.constant 5.000000e-01 : f32
    %240 = vector.broadcast %cst_52 : f32 to vector<1x64xf32>
    %241 = arith.addf %239, %240 : vector<1x64xf32>
    %242 = vector.extract_strided_slice %241 {offsets = [0, 0], sizes = [1, 32], strides = [1, 1]} : vector<1x64xf32> to vector<1x32xf32>
    %243 = vector.extract_strided_slice %241 {offsets = [0, 32], sizes = [1, 32], strides = [1, 1]} : vector<1x64xf32> to vector<1x32xf32>
    %244 = vector.extract_strided_slice %230 {offsets = [0, 64], sizes = [1, 32], strides = [1, 1]} : vector<1x96xf32> to vector<1x32xf32>
    %245 = vector.extract_strided_slice %231 {offsets = [0, 64], sizes = [1, 32], strides = [1, 1]} : vector<1x96xf32> to vector<1x32xf32>
    %246 = arith.addf %245, %5 : vector<1x32xf32>
    %247 = arith.mulf %242, %246 : vector<1x32xf32>
    %248 = arith.addf %244, %247 : vector<1x32xf32>
    %249 = math.tanh %248 : vector<1x32xf32>
    %250 = arith.subf %229, %249 : vector<1x32xf32>
    %251 = arith.mulf %243, %250 : vector<1x32xf32>
    %252 = arith.addf %249, %251 : vector<1x32xf32>
    %253 = vector.extract_strided_slice %211 {offsets = [2, 0], sizes = [1, 96], strides = [1, 1]} : vector<8x96xf32> to vector<1x96xf32>
    %cst_53 = arith.constant dense<0.000000e+00> : vector<1x96xf32>
    %254 = tpu.matmul %252, %12, %cst_53 {dimension_numbers = #tpu.dot_dimension_numbers<[1], [0], [0], [1], [0, 0, 1, 1], [], []>} : vector<1x32xf32>, vector<32x96xf32>, vector<1x96xf32> -> vector<1x96xf32>
    %255 = vector.extract_strided_slice %253 {offsets = [0, 0], sizes = [1, 64], strides = [1, 1]} : vector<1x96xf32> to vector<1x64xf32>
    %256 = vector.extract_strided_slice %254 {offsets = [0, 0], sizes = [1, 64], strides = [1, 1]} : vector<1x96xf32> to vector<1x64xf32>
    %257 = arith.addf %255, %256 : vector<1x64xf32>
    %cst_54 = arith.constant 5.000000e-01 : f32
    %258 = vector.broadcast %cst_54 : f32 to vector<1x64xf32>
    %259 = arith.mulf %258, %257 : vector<1x64xf32>
    %260 = math.tanh %259 : vector<1x64xf32>
    %cst_55 = arith.constant 5.000000e-01 : f32
    %261 = vector.broadcast %cst_55 : f32 to vector<1x64xf32>
    %262 = arith.mulf %261, %260 : vector<1x64xf32>
    %cst_56 = arith.constant 5.000000e-01 : f32
    %263 = vector.broadcast %cst_56 : f32 to vector<1x64xf32>
    %264 = arith.addf %262, %263 : vector<1x64xf32>
    %265 = vector.extract_strided_slice %264 {offsets = [0, 0], sizes = [1, 32], strides = [1, 1]} : vector<1x64xf32> to vector<1x32xf32>
    %266 = vector.extract_strided_slice %264 {offsets = [0, 32], sizes = [1, 32], strides = [1, 1]} : vector<1x64xf32> to vector<1x32xf32>
    %267 = vector.extract_strided_slice %253 {offsets = [0, 64], sizes = [1, 32], strides = [1, 1]} : vector<1x96xf32> to vector<1x32xf32>
    %268 = vector.extract_strided_slice %254 {offsets = [0, 64], sizes = [1, 32], strides = [1, 1]} : vector<1x96xf32> to vector<1x32xf32>
    %269 = arith.addf %268, %5 : vector<1x32xf32>
    %270 = arith.mulf %265, %269 : vector<1x32xf32>
    %271 = arith.addf %267, %270 : vector<1x32xf32>
    %272 = math.tanh %271 : vector<1x32xf32>
    %273 = arith.subf %252, %272 : vector<1x32xf32>
    %274 = arith.mulf %266, %273 : vector<1x32xf32>
    %275 = arith.addf %272, %274 : vector<1x32xf32>
    %276 = vector.extract_strided_slice %211 {offsets = [3, 0], sizes = [1, 96], strides = [1, 1]} : vector<8x96xf32> to vector<1x96xf32>
    %cst_57 = arith.constant dense<0.000000e+00> : vector<1x96xf32>
    %277 = tpu.matmul %275, %12, %cst_57 {dimension_numbers = #tpu.dot_dimension_numbers<[1], [0], [0], [1], [0, 0, 1, 1], [], []>} : vector<1x32xf32>, vector<32x96xf32>, vector<1x96xf32> -> vector<1x96xf32>
    %278 = vector.extract_strided_slice %276 {offsets = [0, 0], sizes = [1, 64], strides = [1, 1]} : vector<1x96xf32> to vector<1x64xf32>
    %279 = vector.extract_strided_slice %277 {offsets = [0, 0], sizes = [1, 64], strides = [1, 1]} : vector<1x96xf32> to vector<1x64xf32>
    %280 = arith.addf %278, %279 : vector<1x64xf32>
    %cst_58 = arith.constant 5.000000e-01 : f32
    %281 = vector.broadcast %cst_58 : f32 to vector<1x64xf32>
    %282 = arith.mulf %281, %280 : vector<1x64xf32>
    %283 = math.tanh %282 : vector<1x64xf32>
    %cst_59 = arith.constant 5.000000e-01 : f32
    %284 = vector.broadcast %cst_59 : f32 to vector<1x64xf32>
    %285 = arith.mulf %284, %283 : vector<1x64xf32>
    %cst_60 = arith.constant 5.000000e-01 : f32
    %286 = vector.broadcast %cst_60 : f32 to vector<1x64xf32>
    %287 = arith.addf %285, %286 : vector<1x64xf32>
    %288 = vector.extract_strided_slice %287 {offsets = [0, 0], sizes = [1, 32], strides = [1, 1]} : vector<1x64xf32> to vector<1x32xf32>
    %289 = vector.extract_strided_slice %287 {offsets = [0, 32], sizes = [1, 32], strides = [1, 1]} : vector<1x64xf32> to vector<1x32xf32>
    %290 = vector.extract_strided_slice %276 {offsets = [0, 64], sizes = [1, 32], strides = [1, 1]} : vector<1x96xf32> to vector<1x32xf32>
    %291 = vector.extract_strided_slice %277 {offsets = [0, 64], sizes = [1, 32], strides = [1, 1]} : vector<1x96xf32> to vector<1x32xf32>
    %292 = arith.addf %291, %5 : vector<1x32xf32>
    %293 = arith.mulf %288, %292 : vector<1x32xf32>
    %294 = arith.addf %290, %293 : vector<1x32xf32>
    %295 = math.tanh %294 : vector<1x32xf32>
    %296 = arith.subf %275, %295 : vector<1x32xf32>
    %297 = arith.mulf %289, %296 : vector<1x32xf32>
    %298 = arith.addf %295, %297 : vector<1x32xf32>
    %299 = vector.extract_strided_slice %211 {offsets = [4, 0], sizes = [1, 96], strides = [1, 1]} : vector<8x96xf32> to vector<1x96xf32>
    %cst_61 = arith.constant dense<0.000000e+00> : vector<1x96xf32>
    %300 = tpu.matmul %298, %12, %cst_61 {dimension_numbers = #tpu.dot_dimension_numbers<[1], [0], [0], [1], [0, 0, 1, 1], [], []>} : vector<1x32xf32>, vector<32x96xf32>, vector<1x96xf32> -> vector<1x96xf32>
    %301 = vector.extract_strided_slice %299 {offsets = [0, 0], sizes = [1, 64], strides = [1, 1]} : vector<1x96xf32> to vector<1x64xf32>
    %302 = vector.extract_strided_slice %300 {offsets = [0, 0], sizes = [1, 64], strides = [1, 1]} : vector<1x96xf32> to vector<1x64xf32>
    %303 = arith.addf %301, %302 : vector<1x64xf32>
    %cst_62 = arith.constant 5.000000e-01 : f32
    %304 = vector.broadcast %cst_62 : f32 to vector<1x64xf32>
    %305 = arith.mulf %304, %303 : vector<1x64xf32>
    %306 = math.tanh %305 : vector<1x64xf32>
    %cst_63 = arith.constant 5.000000e-01 : f32
    %307 = vector.broadcast %cst_63 : f32 to vector<1x64xf32>
    %308 = arith.mulf %307, %306 : vector<1x64xf32>
    %cst_64 = arith.constant 5.000000e-01 : f32
    %309 = vector.broadcast %cst_64 : f32 to vector<1x64xf32>
    %310 = arith.addf %308, %309 : vector<1x64xf32>
    %311 = vector.extract_strided_slice %310 {offsets = [0, 0], sizes = [1, 32], strides = [1, 1]} : vector<1x64xf32> to vector<1x32xf32>
    %312 = vector.extract_strided_slice %310 {offsets = [0, 32], sizes = [1, 32], strides = [1, 1]} : vector<1x64xf32> to vector<1x32xf32>
    %313 = vector.extract_strided_slice %299 {offsets = [0, 64], sizes = [1, 32], strides = [1, 1]} : vector<1x96xf32> to vector<1x32xf32>
    %314 = vector.extract_strided_slice %300 {offsets = [0, 64], sizes = [1, 32], strides = [1, 1]} : vector<1x96xf32> to vector<1x32xf32>
    %315 = arith.addf %314, %5 : vector<1x32xf32>
    %316 = arith.mulf %311, %315 : vector<1x32xf32>
    %317 = arith.addf %313, %316 : vector<1x32xf32>
    %318 = math.tanh %317 : vector<1x32xf32>
    %319 = arith.subf %298, %318 : vector<1x32xf32>
    %320 = arith.mulf %312, %319 : vector<1x32xf32>
    %321 = arith.addf %318, %320 : vector<1x32xf32>
    %322 = vector.extract_strided_slice %211 {offsets = [5, 0], sizes = [1, 96], strides = [1, 1]} : vector<8x96xf32> to vector<1x96xf32>
    %cst_65 = arith.constant dense<0.000000e+00> : vector<1x96xf32>
    %323 = tpu.matmul %321, %12, %cst_65 {dimension_numbers = #tpu.dot_dimension_numbers<[1], [0], [0], [1], [0, 0, 1, 1], [], []>} : vector<1x32xf32>, vector<32x96xf32>, vector<1x96xf32> -> vector<1x96xf32>
    %324 = vector.extract_strided_slice %322 {offsets = [0, 0], sizes = [1, 64], strides = [1, 1]} : vector<1x96xf32> to vector<1x64xf32>
    %325 = vector.extract_strided_slice %323 {offsets = [0, 0], sizes = [1, 64], strides = [1, 1]} : vector<1x96xf32> to vector<1x64xf32>
    %326 = arith.addf %324, %325 : vector<1x64xf32>
    %cst_66 = arith.constant 5.000000e-01 : f32
    %327 = vector.broadcast %cst_66 : f32 to vector<1x64xf32>
    %328 = arith.mulf %327, %326 : vector<1x64xf32>
    %329 = math.tanh %328 : vector<1x64xf32>
    %cst_67 = arith.constant 5.000000e-01 : f32
    %330 = vector.broadcast %cst_67 : f32 to vector<1x64xf32>
    %331 = arith.mulf %330, %329 : vector<1x64xf32>
    %cst_68 = arith.constant 5.000000e-01 : f32
    %332 = vector.broadcast %cst_68 : f32 to vector<1x64xf32>
    %333 = arith.addf %331, %332 : vector<1x64xf32>
    %334 = vector.extract_strided_slice %333 {offsets = [0, 0], sizes = [1, 32], strides = [1, 1]} : vector<1x64xf32> to vector<1x32xf32>
    %335 = vector.extract_strided_slice %333 {offsets = [0, 32], sizes = [1, 32], strides = [1, 1]} : vector<1x64xf32> to vector<1x32xf32>
    %336 = vector.extract_strided_slice %322 {offsets = [0, 64], sizes = [1, 32], strides = [1, 1]} : vector<1x96xf32> to vector<1x32xf32>
    %337 = vector.extract_strided_slice %323 {offsets = [0, 64], sizes = [1, 32], strides = [1, 1]} : vector<1x96xf32> to vector<1x32xf32>
    %338 = arith.addf %337, %5 : vector<1x32xf32>
    %339 = arith.mulf %334, %338 : vector<1x32xf32>
    %340 = arith.addf %336, %339 : vector<1x32xf32>
    %341 = math.tanh %340 : vector<1x32xf32>
    %342 = arith.subf %321, %341 : vector<1x32xf32>
    %343 = arith.mulf %335, %342 : vector<1x32xf32>
    %344 = arith.addf %341, %343 : vector<1x32xf32>
    %345 = vector.extract_strided_slice %211 {offsets = [6, 0], sizes = [1, 96], strides = [1, 1]} : vector<8x96xf32> to vector<1x96xf32>
    %cst_69 = arith.constant dense<0.000000e+00> : vector<1x96xf32>
    %346 = tpu.matmul %344, %12, %cst_69 {dimension_numbers = #tpu.dot_dimension_numbers<[1], [0], [0], [1], [0, 0, 1, 1], [], []>} : vector<1x32xf32>, vector<32x96xf32>, vector<1x96xf32> -> vector<1x96xf32>
    %347 = vector.extract_strided_slice %345 {offsets = [0, 0], sizes = [1, 64], strides = [1, 1]} : vector<1x96xf32> to vector<1x64xf32>
    %348 = vector.extract_strided_slice %346 {offsets = [0, 0], sizes = [1, 64], strides = [1, 1]} : vector<1x96xf32> to vector<1x64xf32>
    %349 = arith.addf %347, %348 : vector<1x64xf32>
    %cst_70 = arith.constant 5.000000e-01 : f32
    %350 = vector.broadcast %cst_70 : f32 to vector<1x64xf32>
    %351 = arith.mulf %350, %349 : vector<1x64xf32>
    %352 = math.tanh %351 : vector<1x64xf32>
    %cst_71 = arith.constant 5.000000e-01 : f32
    %353 = vector.broadcast %cst_71 : f32 to vector<1x64xf32>
    %354 = arith.mulf %353, %352 : vector<1x64xf32>
    %cst_72 = arith.constant 5.000000e-01 : f32
    %355 = vector.broadcast %cst_72 : f32 to vector<1x64xf32>
    %356 = arith.addf %354, %355 : vector<1x64xf32>
    %357 = vector.extract_strided_slice %356 {offsets = [0, 0], sizes = [1, 32], strides = [1, 1]} : vector<1x64xf32> to vector<1x32xf32>
    %358 = vector.extract_strided_slice %356 {offsets = [0, 32], sizes = [1, 32], strides = [1, 1]} : vector<1x64xf32> to vector<1x32xf32>
    %359 = vector.extract_strided_slice %345 {offsets = [0, 64], sizes = [1, 32], strides = [1, 1]} : vector<1x96xf32> to vector<1x32xf32>
    %360 = vector.extract_strided_slice %346 {offsets = [0, 64], sizes = [1, 32], strides = [1, 1]} : vector<1x96xf32> to vector<1x32xf32>
    %361 = arith.addf %360, %5 : vector<1x32xf32>
    %362 = arith.mulf %357, %361 : vector<1x32xf32>
    %363 = arith.addf %359, %362 : vector<1x32xf32>
    %364 = math.tanh %363 : vector<1x32xf32>
    %365 = arith.subf %344, %364 : vector<1x32xf32>
    %366 = arith.mulf %358, %365 : vector<1x32xf32>
    %367 = arith.addf %364, %366 : vector<1x32xf32>
    %368 = vector.extract_strided_slice %211 {offsets = [7, 0], sizes = [1, 96], strides = [1, 1]} : vector<8x96xf32> to vector<1x96xf32>
    %cst_73 = arith.constant dense<0.000000e+00> : vector<1x96xf32>
    %369 = tpu.matmul %367, %12, %cst_73 {dimension_numbers = #tpu.dot_dimension_numbers<[1], [0], [0], [1], [0, 0, 1, 1], [], []>} : vector<1x32xf32>, vector<32x96xf32>, vector<1x96xf32> -> vector<1x96xf32>
    %370 = vector.extract_strided_slice %368 {offsets = [0, 0], sizes = [1, 64], strides = [1, 1]} : vector<1x96xf32> to vector<1x64xf32>
    %371 = vector.extract_strided_slice %369 {offsets = [0, 0], sizes = [1, 64], strides = [1, 1]} : vector<1x96xf32> to vector<1x64xf32>
    %372 = arith.addf %370, %371 : vector<1x64xf32>
    %cst_74 = arith.constant 5.000000e-01 : f32
    %373 = vector.broadcast %cst_74 : f32 to vector<1x64xf32>
    %374 = arith.mulf %373, %372 : vector<1x64xf32>
    %375 = math.tanh %374 : vector<1x64xf32>
    %cst_75 = arith.constant 5.000000e-01 : f32
    %376 = vector.broadcast %cst_75 : f32 to vector<1x64xf32>
    %377 = arith.mulf %376, %375 : vector<1x64xf32>
    %cst_76 = arith.constant 5.000000e-01 : f32
    %378 = vector.broadcast %cst_76 : f32 to vector<1x64xf32>
    %379 = arith.addf %377, %378 : vector<1x64xf32>
    %380 = vector.extract_strided_slice %379 {offsets = [0, 0], sizes = [1, 32], strides = [1, 1]} : vector<1x64xf32> to vector<1x32xf32>
    %381 = vector.extract_strided_slice %379 {offsets = [0, 32], sizes = [1, 32], strides = [1, 1]} : vector<1x64xf32> to vector<1x32xf32>
    %382 = vector.extract_strided_slice %368 {offsets = [0, 64], sizes = [1, 32], strides = [1, 1]} : vector<1x96xf32> to vector<1x32xf32>
    %383 = vector.extract_strided_slice %369 {offsets = [0, 64], sizes = [1, 32], strides = [1, 1]} : vector<1x96xf32> to vector<1x32xf32>
    %384 = arith.addf %383, %5 : vector<1x32xf32>
    %385 = arith.mulf %380, %384 : vector<1x32xf32>
    %386 = arith.addf %382, %385 : vector<1x32xf32>
    %387 = math.tanh %386 : vector<1x32xf32>
    %388 = arith.subf %367, %387 : vector<1x32xf32>
    %389 = arith.mulf %381, %388 : vector<1x32xf32>
    %390 = arith.addf %387, %389 : vector<1x32xf32>
    %cst_77 = arith.constant dense<0.000000e+00> : vector<1x64xf32>
    %391 = tpu.matmul %390, %14, %cst_77 {dimension_numbers = #tpu.dot_dimension_numbers<[1], [0], [0], [1], [0, 0, 1, 1], [], []>} : vector<1x32xf32>, vector<32x64xf32>, vector<1x64xf32> -> vector<1x64xf32>
    %392 = arith.addf %391, %6 : vector<1x64xf32>
    %cst_78 = arith.constant dense<0.000000e+00> : vector<8x64xf32>
    %393 = tpu.matmul %208, %13, %cst_78 {dimension_numbers = #tpu.dot_dimension_numbers<[1], [0], [0], [1], [0, 0, 1, 1], [], []>} : vector<8x32xf32>, vector<32x64xf32>, vector<8x64xf32> -> vector<8x64xf32>
    %394 = vector.broadcast %392 : vector<1x64xf32> to vector<8x64xf32>
    %395 = arith.addf %393, %394 : vector<8x64xf32>
    %cst_79 = arith.constant 0.000000e+00 : f32
    %396 = vector.broadcast %cst_79 : f32 to vector<8x64xf32>
    %397 = arith.maximumf %395, %396 : vector<8x64xf32>
    %cst_80 = arith.constant dense<0.000000e+00> : vector<8x64xf32>
    %398 = tpu.matmul %397, %15, %cst_80 {dimension_numbers = #tpu.dot_dimension_numbers<[1], [0], [0], [1], [0, 0, 1, 1], [], []>} : vector<8x64xf32>, vector<64x64xf32>, vector<8x64xf32> -> vector<8x64xf32>
    %399 = vector.broadcast %7 : vector<1x64xf32> to vector<8x64xf32>
    %400 = arith.addf %398, %399 : vector<8x64xf32>
    %cst_81 = arith.constant 0.000000e+00 : f32
    %401 = vector.broadcast %cst_81 : f32 to vector<8x64xf32>
    %402 = arith.maximumf %400, %401 : vector<8x64xf32>
    %403 = vector.broadcast %8 : vector<1x64xf32> to vector<8x64xf32>
    %404 = arith.mulf %402, %403 : vector<8x64xf32>
    %cst_82 = arith.constant dense<0.000000e+00> : vector<8xf32>
    %405 = vector.multi_reduction <add>, %404, %cst_82 [1] : vector<8x64xf32> to vector<8xf32>
    %406 = vector.shape_cast %405 : vector<8xf32> to vector<8x1xf32>
    %407 = vector.broadcast %9 : vector<1x1xf32> to vector<8x1xf32>
    %408 = arith.addf %406, %407 : vector<8x1xf32>
    %cst_83 = arith.constant dense<0xFF800000> : vector<1xf32>
    %409 = vector.multi_reduction <maximumf>, %408, %cst_83 [0] : vector<8x1xf32> to vector<1xf32>
    %410 = vector.shape_cast %409 : vector<1xf32> to vector<1x1xf32>
    %411 = vector.broadcast %410 : vector<1x1xf32> to vector<8x1xf32>
    %412 = arith.subf %408, %411 : vector<8x1xf32>
    %413 = math.exp %412 : vector<8x1xf32>
    %cst_84 = arith.constant dense<0.000000e+00> : vector<1xf32>
    %414 = vector.multi_reduction <add>, %413, %cst_84 [0] : vector<8x1xf32> to vector<1xf32>
    %415 = vector.shape_cast %414 : vector<1xf32> to vector<1x1xf32>
    %416 = vector.broadcast %415 : vector<1x1xf32> to vector<8x1xf32>
    %417 = arith.divf %413, %416 : vector<8x1xf32>
    %c0_85 = arith.constant 0 : index
    %c0_86 = arith.constant 0 : index
    %418 = vector.load %arg4[%c0_85, %c0_86] : memref<8x1xf32, #tpu.memory_space<vmem>>, vector<8x1xf32>
    tpu.vector_store %arg4[%c0_85, %c0_86], %417 {strides = array<i32>} : memref<8x1xf32, #tpu.memory_space<vmem>>, vector<8x1xf32>,
    return
  }
}

</mosaic_0001>

<llo_original>
// kernel: meta_solver_forward.1
$region0: #{meta_solver_forward.1}
  #allocation0 [shape = 'u32[]', space=smem, size = 0x4, offset = 0x4, fixed_abs, tag = 'smem constant byte address 0x4 - core index']
  #allocation1 [shape = 'u32[72,128]{1,0:T(1,128)}', space=vmem, size = 0x9000, scoped, tag = 'internal scratch']
  %s0 = inlined_call_operand.vmem [shape: f32[64,1], index: 0, kind: input, shape index: {}]
  %s1 = inlined_call_operand.vmem [shape: f32[96,96], index: 1, kind: input, shape index: {}]
  %s2 = inlined_call_operand.vmem [shape: f32[8,96], index: 2, kind: input, shape index: {}]
  %s3 = inlined_call_operand.vmem [shape: f32[128,64], index: 3, kind: input, shape index: {}]
  %s4 = inlined_call_operand.vmem [shape: f32[8,1], index: 4, kind: output, shape index: {}]
  %s5 = sld [smem:[#allocation0]]
  $region26: #{meta_solver_forward.1} parent=0
    _
  %s7 = ssub.s32 1, %s5
  %s8 = scalar_select 0, %s7, %s5
  // Predicated region
  $region2: #{meta_solver_forward.1} parent=0 // pred_check
    _
  $region3: #{meta_solver_forward.1} parent=0 // pred_check_branch
    %10 = sbr.rel (0) target = $region5
  $region4: #{meta_solver_forward.1} parent=0 // pred_region
    _
  $region5: #{meta_solver_forward.1} parent=0 // pred_fallthru
    _
  // Predicated region
  $region6: #{meta_solver_forward.1} parent=0 // pred_check
    _
  $region7: #{meta_solver_forward.1} parent=0 // pred_check_branch
    %12 = sbr.rel (0) target = $region9
  $region8: #{meta_solver_forward.1} parent=0 // pred_region
    _
  $region9: #{meta_solver_forward.1} parent=0 // pred_fallthru
    _
  // Predicated region
  $region10: #{meta_solver_forward.1} parent=0 // pred_check
    _
  $region11: #{meta_solver_forward.1} parent=0 // pred_check_branch
    %14 = sbr.rel (0) target = $region13
  $region12: #{meta_solver_forward.1} parent=0 // pred_region
    _
  $region13: #{meta_solver_forward.1} parent=0 // pred_fallthru
    _
  // Predicated region
  $region14: #{meta_solver_forward.1} parent=0 // pred_check
    _
  $region15: #{meta_solver_forward.1} parent=0 // pred_check_branch
    %16 = sbr.rel (0) target = $region17
  $region16: #{meta_solver_forward.1} parent=0 // pred_region
    _
  $region17: #{meta_solver_forward.1} parent=0 // pred_fallthru
    _
  %v17 = vld [vmem:[%s2] sm:$0xff]
  %v18 = vld [vmem:[%s1] sm:$0xff]
  %v19 = vld [vmem:[%s1 + $0x8] sm:$0xff]
  %v20 = vld [vmem:[%s1 + $0x10] sm:$0xff]
  %v21 = vld [vmem:[%s1 + $0x18] sm:$0xff]
  %v22 = vld [vmem:[%s1 + $0x20] sm:$0xff]
  %v23 = vld [vmem:[%s1 + $0x28] sm:$0xff]
  %v24 = vld [vmem:[%s1 + $0x30] sm:$0xff]
  %v25 = vld [vmem:[%s1 + $0x38] sm:$0xff]
  %v26 = vld [vmem:[%s1 + $0x40] sm:$0xff]
  %v27 = vld [vmem:[%s1 + $0x48] sm:$0xff]
  %v28 = vld [vmem:[%s1 + $0x50] sm:$0xff]
  %v29 = vld [vmem:[%s1 + $0x58] sm:$0xff]
  %v30 = vld [vmem:[%s3] sm:$0xff]
  %v31 = vld [vmem:[%s3 + $0x8] sm:$0xff]
  %v32 = vld [vmem:[%s3 + $0x10] sm:$0xff]
  %v33 = vld [vmem:[%s3 + $0x18] sm:$0xff]
  %v34 = vld [vmem:[%s3 + $0x20] sm:$0xff]
  %v35 = vld [vmem:[%s3 + $0x28] sm:$0xff]
  %v36 = vld [vmem:[%s3 + $0x30] sm:$0xff]
  %v37 = vld [vmem:[%s3 + $0x38] sm:$0xff]
  %v38 = vld [vmem:[%s3 + $0x40] sm:$0xff]
  %v39 = vld [vmem:[%s3 + $0x48] sm:$0xff]
  %v40 = vld [vmem:[%s3 + $0x50] sm:$0xff]
  %v41 = vld [vmem:[%s3 + $0x58] sm:$0xff]
  %v42 = vld [vmem:[%s3 + $0x60] sm:$0xff]
  %v43 = vld [vmem:[%s3 + $0x68] sm:$0xff]
  %v44 = vld [vmem:[%s3 + $0x70] sm:$0xff]
  %v45 = vld [vmem:[%s3 + $0x78] sm:$0xff]
  %v46 = vld [vmem:[%s0] sm:$0xff]
  %v47 = vld [vmem:[%s0 + $0x8] sm:$0xff]
  %v48 = vld [vmem:[%s0 + $0x10] sm:$0xff]
  %v49 = vld [vmem:[%s0 + $0x18] sm:$0xff]
  %v50 = vld [vmem:[%s0 + $0x20] sm:$0xff]
  %v51 = vld [vmem:[%s0 + $0x28] sm:$0xff]
  %v52 = vld [vmem:[%s0 + $0x30] sm:$0xff]
  %v53 = vld [vmem:[%s0 + $0x38] sm:$0xff]
  %55 = vset.pattern.permute.xlu0 0
  %56 = vperm.xlu0 %55, %v46
  %v57 = vpop.permute.xlu0 %56
  %60 = vset.pattern.permute.xlu0 0
  %61 = vperm.xlu0 %60, %v47
  %v62 = vpop.permute.xlu0 %61
  %65 = vset.pattern.permute.xlu0 0
  %66 = vperm.xlu0 %65, %v48
  %v67 = vpop.permute.xlu0 %66
  %70 = vset.pattern.permute.xlu0 0
  %71 = vperm.xlu0 %70, %v49
  %v72 = vpop.permute.xlu0 %71
  %75 = vset.pattern.permute.xlu0 0
  %76 = vperm.xlu0 %75, %v50
  %v77 = vpop.permute.xlu0 %76
  %80 = vset.pattern.permute.xlu0 0
  %81 = vperm.xlu0 %80, %v51
  %v82 = vpop.permute.xlu0 %81
  %85 = vset.pattern.permute.xlu0 0
  %86 = vperm.xlu0 %85, %v52
  %v87 = vpop.permute.xlu0 %86
  %90 = vset.pattern.permute.xlu0 0
  %91 = vperm.xlu0 %90, %v53
  %v92 = vpop.permute.xlu0 %91
  %v94 = vperm.slane %v17, 0
  %v95 = vmul.f32 %v57, %v94
  %v96 = vmul.f32 %v62, %v94
  %v97 = vmul.f32 %v67, %v94
  %v98 = vmul.f32 %v72, %v94
  %v99 = vmul.f32 %v77, %v94
  %v100 = vmul.f32 %v82, %v94
  %v101 = vmul.f32 %v87, %v94
  %v102 = vmul.f32 %v92, %v94
  %v103 = vperm.slane %v17, 1
  %v104 = vadd.f32 %v95, %v103
  %v105 = vadd.f32 %v96, %v103
  %v106 = vadd.f32 %v97, %v103
  %v107 = vadd.f32 %v98, %v103
  %v108 = vadd.f32 %v99, %v103
  %v109 = vadd.f32 %v100, %v103
  %v110 = vadd.f32 %v101, %v103
  %v111 = vadd.f32 %v102, %v103
  %v112 = vmul.f32 %v104, 0.5
  %v113 = vtanh.pop %v112
  %v114 = vmul.f32 %v113, 0.5
  %v115 = vadd.f32 %v114, 0.5
  %v116 = vperm.slane %v17, 3
  %v117 = vmul.f32 %v115, %v116
  %119 = vrot.lane.b32.xlu0 %v117, 64
  %v120 = vpop.permute.xlu0 %119
  %v122 = vadd.f32 %v104, %v120
  %v123 = vtanh.pop %v122
  %v124 = vsub.f32 1.0, %v115
  %126 = vrot.lane.b32.xlu0 %v123, 96
  %v127 = vpop.permute.xlu0 %126
  %v129 = vmul.f32 %v124, %v127
  %131 = vrot.lane.b32.xlu0 %v129, 96
  %v132 = vpop.permute.xlu0 %131
  %vm133 = vcmask 261120
  %v134 = vsel %vm133, %v132, 0
  %136 = vmatpush.msra.mxu0 0.0
  %137 = vmatpush.msra.mxu0 0.0
  %138 = vmatpush.msra.mxu0 0.0
  %139 = vmatpush.msra.mxu0 0.0
  %140 = vmatpush.msra.mxu0 0.0
  %141 = vmatpush.msra.mxu0 0.0
  %142 = vmatpush.msra.mxu0 0.0
  %143 = vmatpush.msra.mxu0 0.0
  %144 = vmatpush.msra.mxu0 0.0
  %145 = vmatpush.msra.mxu0 0.0
  %146 = vmatpush.msra.mxu0 0.0
  %147 = vmatpush.msra.mxu0 0.0
  %148 = vmatpush.msra.mxu0 %v21
  %149 = vmatpush.msra.mxu0 %v20
  %150 = vmatpush.msra.mxu0 %v19
  %151 = vmatpush.msra.mxu0 %v18
  %152 = vmatmul.f32.gmra.mxu0 %v134
  %v153 = vpop.f32.mrf.mxu0
  %v154 = vadd.f32 0.0, %v153
  %155 = vdwg.mxu0
  %v156 = vadd.f32 %v105, %v154
  %v157 = vmul.f32 %v156, 0.5
  %v158 = vtanh.pop %v157
  %v159 = vmul.f32 %v158, 0.5
  %v160 = vadd.f32 %v159, 0.5
  %162 = vrot.lane.b32.xlu0 %v116, 64
  %v163 = vpop.permute.xlu0 %162
  %v165 = vadd.f32 %v154, %v163
  %167 = vrot.lane.b32.xlu0 %v165, 64
  %v168 = vpop.permute.xlu0 %167
  %v170 = vmul.f32 %v160, %v168
  %172 = vrot.lane.b32.xlu0 %v170, 64
  %v173 = vpop.permute.xlu0 %172
  %v175 = vadd.f32 %v105, %v173
  %v176 = vtanh.pop %v175
  %178 = vrot.lane.b32.xlu0 %v176, 96
  %v179 = vpop.permute.xlu0 %178
  %v181 = vsub.f32 %v129, %v179
  %v182 = vmul.f32 %v160, %v181
  %184 = vrot.lane.b32.xlu0 %v182, 32
  %v185 = vpop.permute.xlu0 %184
  %v187 = vadd.f32 %v176, %v185
  %189 = vrot.lane.b32.xlu0 %v187, 64
  %v190 = vpop.permute.xlu0 %189
  %v191 = vsel %vm133, %v190, 0
  %193 = vmatpush.msra.mxu0 0.0
  %194 = vmatpush.msra.mxu0 0.0
  %195 = vmatpush.msra.mxu0 0.0
  %196 = vmatpush.msra.mxu0 0.0
  %197 = vmatpush.msra.mxu0 0.0
  %198 = vmatpush.msra.mxu0 0.0
  %199 = vmatpush.msra.mxu0 0.0
  %200 = vmatpush.msra.mxu0 0.0
  %201 = vmatpush.msra.mxu0 0.0
  %202 = vmatpush.msra.mxu0 0.0
  %203 = vmatpush.msra.mxu0 0.0
  %204 = vmatpush.msra.mxu0 0.0
  %205 = vmatpush.msra.mxu0 %v21
  %206 = vmatpush.msra.mxu0 %v20
  %207 = vmatpush.msra.mxu0 %v19
  %208 = vmatpush.msra.mxu0 %v18
  %209 = vmatmul.f32.gmra.mxu0 %v191
  %v210 = vpop.f32.mrf.mxu0
  %v211 = vadd.f32 0.0, %v210
  %212 = vdwg.mxu0
  %v213 = vadd.f32 %v106, %v211
  %v214 = vmul.f32 %v213, 0.5
  %v215 = vtanh.pop %v214
  %v216 = vmul.f32 %v215, 0.5
  %v217 = vadd.f32 %v216, 0.5
  %v218 = vadd.f32 %v211, %v163
  %220 = vrot.lane.b32.xlu0 %v218, 64
  %v221 = vpop.permute.xlu0 %220
  %v223 = vmul.f32 %v217, %v221
  %225 = vrot.lane.b32.xlu0 %v223, 64
  %v226 = vpop.permute.xlu0 %225
  %v228 = vadd.f32 %v106, %v226
  %v229 = vtanh.pop %v228
  %v230 = vsub.f32 %v187, %v229
  %232 = vrot.lane.b32.xlu0 %v230, 96
  %v233 = vpop.permute.xlu0 %232
  %v235 = vmul.f32 %v217, %v233
  %237 = vrot.lane.b32.xlu0 %v235, 32
  %v238 = vpop.permute.xlu0 %237
  %v240 = vadd.f32 %v229, %v238
  %242 = vrot.lane.b32.xlu0 %v240, 64
  %v243 = vpop.permute.xlu0 %242
  %v244 = vsel %vm133, %v243, 0
  %246 = vmatpush.msra.mxu0 0.0
  %247 = vmatpush.msra.mxu0 0.0
  %248 = vmatpush.msra.mxu0 0.0
  %249 = vmatpush.msra.mxu0 0.0
  %250 = vmatpush.msra.mxu0 0.0
  %251 = vmatpush.msra.mxu0 0.0
  %252 = vmatpush.msra.mxu0 0.0
  %253 = vmatpush.msra.mxu0 0.0
  %254 = vmatpush.msra.mxu0 0.0
  %255 = vmatpush.msra.mxu0 0.0
  %256 = vmatpush.msra.mxu0 0.0
  %257 = vmatpush.msra.mxu0 0.0
  %258 = vmatpush.msra.mxu0 %v21
  %259 = vmatpush.msra.mxu0 %v20
  %260 = vmatpush.msra.mxu0 %v19
  %261 = vmatpush.msra.mxu0 %v18
  %262 = vmatmul.f32.gmra.mxu0 %v244
  %v263 = vpop.f32.mrf.mxu0
  %v264 = vadd.f32 0.0, %v263
  %265 = vdwg.mxu0
  %v266 = vadd.f32 %v107, %v264
  %v267 = vmul.f32 %v266, 0.5
  %v268 = vtanh.pop %v267
  %v269 = vmul.f32 %v268, 0.5
  %v270 = vadd.f32 %v269, 0.5
  %v271 = vadd.f32 %v264, %v163
  %273 = vrot.lane.b32.xlu0 %v271, 64
  %v274 = vpop.permute.xlu0 %273
  %v276 = vmul.f32 %v270, %v274
  %278 = vrot.lane.b32.xlu0 %v276, 64
  %v279 = vpop.permute.xlu0 %278
  %v281 = vadd.f32 %v107, %v279
  %v282 = vtanh.pop %v281
  %v283 = vsub.f32 %v240, %v282
  %285 = vrot.lane.b32.xlu0 %v283, 96
  %v286 = vpop.permute.xlu0 %285
  %v288 = vmul.f32 %v270, %v286
  %290 = vrot.lane.b32.xlu0 %v288, 32
  %v291 = vpop.permute.xlu0 %290
  %v293 = vadd.f32 %v282, %v291
  %295 = vrot.lane.b32.xlu0 %v293, 64
  %v296 = vpop.permute.xlu0 %295
  %v297 = vsel %vm133, %v296, 0
  %299 = vmatpush.msra.mxu0 0.0
  %300 = vmatpush.msra.mxu0 0.0
  %301 = vmatpush.msra.mxu0 0.0
  %302 = vmatpush.msra.mxu0 0.0
  %303 = vmatpush.msra.mxu0 0.0
  %304 = vmatpush.msra.mxu0 0.0
  %305 = vmatpush.msra.mxu0 0.0
  %306 = vmatpush.msra.mxu0 0.0
  %307 = vmatpush.msra.mxu0 0.0
  %308 = vmatpush.msra.mxu0 0.0
  %309 = vmatpush.msra.mxu0 0.0
  %310 = vmatpush.msra.mxu0 0.0
  %311 = vmatpush.msra.mxu0 %v21
  %312 = vmatpush.msra.mxu0 %v20
  %313 = vmatpush.msra.mxu0 %v19
  %314 = vmatpush.msra.mxu0 %v18
  %315 = vmatmul.f32.gmra.mxu0 %v297
  %v316 = vpop.f32.mrf.mxu0
  %v317 = vadd.f32 0.0, %v316
  %318 = vdwg.mxu0
  %v319 = vadd.f32 %v108, %v317
  %v320 = vmul.f32 %v319, 0.5
  %v321 = vtanh.pop %v320
  %v322 = vmul.f32 %v321, 0.5
  %v323 = vadd.f32 %v322, 0.5
  %v324 = vadd.f32 %v317, %v163
  %326 = vrot.lane.b32.xlu0 %v324, 64
  %v327 = vpop.permute.xlu0 %326
  %v329 = vmul.f32 %v323, %v327
  %331 = vrot.lane.b32.xlu0 %v329, 64
  %v332 = vpop.permute.xlu0 %331
  %v334 = vadd.f32 %v108, %v332
  %v335 = vtanh.pop %v334
  %v336 = vsub.f32 %v293, %v335
  %338 = vrot.lane.b32.xlu0 %v336, 96
  %v339 = vpop.permute.xlu0 %338
  %v341 = vmul.f32 %v323, %v339
  %343 = vrot.lane.b32.xlu0 %v341, 32
  %v344 = vpop.permute.xlu0 %343
  %v346 = vadd.f32 %v335, %v344
  %348 = vrot.lane.b32.xlu0 %v346, 64
  %v349 = vpop.permute.xlu0 %348
  %v350 = vsel %vm133, %v349, 0
  %352 = vmatpush.msra.mxu0 0.0
  %353 = vmatpush.msra.mxu0 0.0
  %354 = vmatpush.msra.mxu0 0.0
  %355 = vmatpush.msra.mxu0 0.0
  %356 = vmatpush.msra.mxu0 0.0
  %357 = vmatpush.msra.mxu0 0.0
  %358 = vmatpush.msra.mxu0 0.0
  %359 = vmatpush.msra.mxu0 0.0
  %360 = vmatpush.msra.mxu0 0.0
  %361 = vmatpush.msra.mxu0 0.0
  %362 = vmatpush.msra.mxu0 0.0
  %363 = vmatpush.msra.mxu0 0.0
  %364 = vmatpush.msra.mxu0 %v21
  %365 = vmatpush.msra.mxu0 %v20
  %366 = vmatpush.msra.mxu0 %v19
  %367 = vmatpush.msra.mxu0 %v18
  %368 = vmatmul.f32.gmra.mxu0 %v350
  %v369 = vpop.f32.mrf.mxu0
  %v370 = vadd.f32 0.0, %v369
  %371 = vdwg.mxu0
  %v372 = vadd.f32 %v109, %v370
  %v373 = vmul.f32 %v372, 0.5
  %v374 = vtanh.pop %v373
  %v375 = vmul.f32 %v374, 0.5
  %v376 = vadd.f32 %v375, 0.5
  %v377 = vadd.f32 %v370, %v163
  %379 = vrot.lane.b32.xlu0 %v377, 64
  %v380 = vpop.permute.xlu0 %379
  %v382 = vmul.f32 %v376, %v380
  %384 = vrot.lane.b32.xlu0 %v382, 64
  %v385 = vpop.permute.xlu0 %384
  %v387 = vadd.f32 %v109, %v385
  %v388 = vtanh.pop %v387
  %v389 = vsub.f32 %v346, %v388
  %391 = vrot.lane.b32.xlu0 %v389, 96
  %v392 = vpop.permute.xlu0 %391
  %v394 = vmul.f32 %v376, %v392
  %396 = vrot.lane.b32.xlu0 %v394, 32
  %v397 = vpop.permute.xlu0 %396
  %v399 = vadd.f32 %v388, %v397
  %401 = vrot.lane.b32.xlu0 %v399, 64
  %v402 = vpop.permute.xlu0 %401
  %v403 = vsel %vm133, %v402, 0
  %405 = vmatpush.msra.mxu0 0.0
  %406 = vmatpush.msra.mxu0 0.0
  %407 = vmatpush.msra.mxu0 0.0
  %408 = vmatpush.msra.mxu0 0.0
  %409 = vmatpush.msra.mxu0 0.0
  %410 = vmatpush.msra.mxu0 0.0
  %411 = vmatpush.msra.mxu0 0.0
  %412 = vmatpush.msra.mxu0 0.0
  %413 = vmatpush.msra.mxu0 0.0
  %414 = vmatpush.msra.mxu0 0.0
  %415 = vmatpush.msra.mxu0 0.0
  %416 = vmatpush.msra.mxu0 0.0
  %417 = vmatpush.msra.mxu0 %v21
  %418 = vmatpush.msra.mxu0 %v20
  %419 = vmatpush.msra.mxu0 %v19
  %420 = vmatpush.msra.mxu0 %v18
  %421 = vmatmul.f32.gmra.mxu0 %v403
  %v422 = vpop.f32.mrf.mxu0
  %v423 = vadd.f32 0.0, %v422
  %424 = vdwg.mxu0
  %v425 = vadd.f32 %v110, %v423
  %v426 = vmul.f32 %v425, 0.5
  %v427 = vtanh.pop %v426
  %v428 = vmul.f32 %v427, 0.5
  %v429 = vadd.f32 %v428, 0.5
  %v430 = vadd.f32 %v423, %v163
  %432 = vrot.lane.b32.xlu0 %v430, 64
  %v433 = vpop.permute.xlu0 %432
  %v435 = vmul.f32 %v429, %v433
  %437 = vrot.lane.b32.xlu0 %v435, 64
  %v438 = vpop.permute.xlu0 %437
  %v440 = vadd.f32 %v110, %v438
  %v441 = vtanh.pop %v440
  %v442 = vsub.f32 %v399, %v441
  %444 = vrot.lane.b32.xlu0 %v442, 96
  %v445 = vpop.permute.xlu0 %444
  %v447 = vmul.f32 %v429, %v445
  %449 = vrot.lane.b32.xlu0 %v447, 32
  %v450 = vpop.permute.xlu0 %449
  %v452 = vadd.f32 %v441, %v450
  %454 = vrot.lane.b32.xlu0 %v452, 64
  %v455 = vpop.permute.xlu0 %454
  %v456 = vsel %vm133, %v455, 0
  %458 = vmatpush.msra.mxu0 0.0
  %459 = vmatpush.msra.mxu0 0.0
  %460 = vmatpush.msra.mxu0 0.0
  %461 = vmatpush.msra.mxu0 0.0
  %462 = vmatpush.msra.mxu0 0.0
  %463 = vmatpush.msra.mxu0 0.0
  %464 = vmatpush.msra.mxu0 0.0
  %465 = vmatpush.msra.mxu0 0.0
  %466 = vmatpush.msra.mxu0 0.0
  %467 = vmatpush.msra.mxu0 0.0
  %468 = vmatpush.msra.mxu0 0.0
  %469 = vmatpush.msra.mxu0 0.0
  %470 = vmatpush.msra.mxu0 %v21
  %471 = vmatpush.msra.mxu0 %v20
  %472 = vmatpush.msra.mxu0 %v19
  %473 = vmatpush.msra.mxu0 %v18
  %474 = vmatmul.f32.gmra.mxu0 %v456
  %v475 = vpop.f32.mrf.mxu0
  %v476 = vadd.f32 0.0, %v475
  %477 = vdwg.mxu0
  %v478 = vadd.f32 %v111, %v476
  %v479 = vmul.f32 %v478, 0.5
  %v480 = vtanh.pop %v479
  %v481 = vmul.f32 %v480, 0.5
  %v482 = vadd.f32 %v481, 0.5
  %v483 = vadd.f32 %v476, %v163
  %485 = vrot.lane.b32.xlu0 %v483, 64
  %v486 = vpop.permute.xlu0 %485
  %v488 = vmul.f32 %v482, %v486
  %490 = vrot.lane.b32.xlu0 %v488, 64
  %v491 = vpop.permute.xlu0 %490
  %v493 = vadd.f32 %v111, %v491
  %v494 = vtanh.pop %v493
  %v495 = vsub.f32 %v452, %v494
  %497 = vrot.lane.b32.xlu0 %v495, 96
  %v498 = vpop.permute.xlu0 %497
  %v500 = vmul.f32 %v482, %v498
  %502 = vrot.lane.b32.xlu0 %v500, 32
  %v503 = vpop.permute.xlu0 %502
  %v505 = vadd.f32 %v494, %v503
  %v506 = vperm.slane %v17, 2
  %508 = vrot.lane.b32.xlu0 %v505, 64
  %v509 = vpop.permute.xlu0 %508
  %v510 = vsel %vm133, %v509, 0
  %512 = vmatpush.msra.mxu0 0.0
  %513 = vmatpush.msra.mxu0 0.0
  %514 = vmatpush.msra.mxu0 0.0
  %515 = vmatpush.msra.mxu0 0.0
  %516 = vmatpush.msra.mxu0 0.0
  %517 = vmatpush.msra.mxu0 0.0
  %518 = vmatpush.msra.mxu0 0.0
  %519 = vmatpush.msra.mxu0 0.0
  %520 = vmatpush.msra.mxu0 0.0
  %521 = vmatpush.msra.mxu0 0.0
  %522 = vmatpush.msra.mxu0 0.0
  %523 = vmatpush.msra.mxu0 0.0
  %524 = vmatpush.msra.mxu0 %v25
  %525 = vmatpush.msra.mxu0 %v24
  %526 = vmatpush.msra.mxu0 %v23
  %527 = vmatpush.msra.mxu0 %v22
  %528 = vmatmul.f32.gmra.mxu0 %v510
  %v529 = vpop.f32.mrf.mxu0
  %v530 = vadd.f32 %v506, %v529
  %531 = vdwg.mxu0
  %v532 = vmul.f32 %v530, 0.5
  %v533 = vtanh.pop %v532
  %v534 = vmul.f32 %v533, 0.5
  %v535 = vadd.f32 %v534, 0.5
  %v537 = vrot.slane %v17, 3
  %538 = vrot.lane.b32.xlu0 %v537, 96
  %v539 = vpop.permute.xlu0 %538
  %v541 = vmul.f32 %v535, %v539
  %543 = vrot.lane.b32.xlu0 %v541, 64
  %v544 = vpop.permute.xlu0 %543
  %v546 = vadd.f32 %v530, %v544
  %v547 = vtanh.pop %v546
  %v548 = vsub.f32 1.0, %v535
  %550 = vrot.lane.b32.xlu0 %v547, 96
  %v551 = vpop.permute.xlu0 %550
  %v553 = vmul.f32 %v548, %v551
  %555 = vrot.lane.b32.xlu0 %v553, 96
  %v556 = vpop.permute.xlu0 %555
  %v557 = vsel %vm133, %v556, 0
  %559 = vmatpush.msra.mxu0 0.0
  %560 = vmatpush.msra.mxu0 0.0
  %561 = vmatpush.msra.mxu0 0.0
  %562 = vmatpush.msra.mxu0 0.0
  %563 = vmatpush.msra.mxu0 0.0
  %564 = vmatpush.msra.mxu0 0.0
  %565 = vmatpush.msra.mxu0 0.0
  %566 = vmatpush.msra.mxu0 0.0
  %567 = vmatpush.msra.mxu0 0.0
  %568 = vmatpush.msra.mxu0 0.0
  %569 = vmatpush.msra.mxu0 0.0
  %570 = vmatpush.msra.mxu0 0.0
  %571 = vmatpush.msra.mxu0 %v29
  %572 = vmatpush.msra.mxu0 %v28
  %573 = vmatpush.msra.mxu0 %v27
  %574 = vmatpush.msra.mxu0 %v26
  %575 = vmatmul.f32.gmra.mxu0 %v557
  %v576 = vpop.f32.mrf.mxu0
  %v577 = vadd.f32 0.0, %v576
  %578 = vdwg.mxu0
  %v580 = vrot.slane %v577, 7
  %v582 = vadd.f32 %v530, %v580
  %v583 = vmul.f32 %v582, 0.5
  %v584 = vtanh.pop %v583
  %v585 = vmul.f32 %v584, 0.5
  %v586 = vadd.f32 %v585, 0.5
  %587 = vrot.lane.b32.xlu0 %v537, 32
  %v588 = vpop.permute.xlu0 %587
  %v590 = vadd.f32 %v577, %v588
  %v592 = vrot.slane %v590, 7
  %593 = vrot.lane.b32.xlu0 %v592, 64
  %v594 = vpop.permute.xlu0 %593
  %v596 = vmul.f32 %v586, %v594
  %598 = vrot.lane.b32.xlu0 %v596, 64
  %v599 = vpop.permute.xlu0 %598
  %v601 = vadd.f32 %v530, %v599
  %v602 = vtanh.pop %v601
  %v604 = vrot.slane %v602, 1
  %605 = vrot.lane.b32.xlu0 %v604, 96
  %v606 = vpop.permute.xlu0 %605
  %v608 = vsub.f32 %v553, %v606
  %v610 = vrot.slane %v608, 7
  %v612 = vmul.f32 %v586, %v610
  %614 = vrot.lane.b32.xlu0 %v612, 32
  %v615 = vpop.permute.xlu0 %614
  %v617 = vadd.f32 %v602, %v615
  %v619 = vrot.slane %v617, 1
  %620 = vrot.lane.b32.xlu0 %v619, 64
  %v621 = vpop.permute.xlu0 %620
  %v622 = vsel %vm133, %v621, 0
  %624 = vmatpush.msra.mxu0 0.0
  %625 = vmatpush.msra.mxu0 0.0
  %626 = vmatpush.msra.mxu0 0.0
  %627 = vmatpush.msra.mxu0 0.0
  %628 = vmatpush.msra.mxu0 0.0
  %629 = vmatpush.msra.mxu0 0.0
  %630 = vmatpush.msra.mxu0 0.0
  %631 = vmatpush.msra.mxu0 0.0
  %632 = vmatpush.msra.mxu0 0.0
  %633 = vmatpush.msra.mxu0 0.0
  %634 = vmatpush.msra.mxu0 0.0
  %635 = vmatpush.msra.mxu0 0.0
  %636 = vmatpush.msra.mxu0 %v29
  %637 = vmatpush.msra.mxu0 %v28
  %638 = vmatpush.msra.mxu0 %v27
  %639 = vmatpush.msra.mxu0 %v26
  %640 = vmatmul.f32.gmra.mxu0 %v622
  %v641 = vpop.f32.mrf.mxu0
  %v642 = vadd.f32 0.0, %v641
  %643 = vdwg.mxu0
  %v645 = vrot.slane %v642, 6
  %v647 = vadd.f32 %v530, %v645
  %v648 = vmul.f32 %v647, 0.5
  %v649 = vtanh.pop %v648
  %v650 = vmul.f32 %v649, 0.5
  %v651 = vadd.f32 %v650, 0.5
  %v652 = vadd.f32 %v642, %v588
  %v654 = vrot.slane %v652, 6
  %655 = vrot.lane.b32.xlu0 %v654, 64
  %v656 = vpop.permute.xlu0 %655
  %v658 = vmul.f32 %v651, %v656
  %660 = vrot.lane.b32.xlu0 %v658, 64
  %v661 = vpop.permute.xlu0 %660
  %v663 = vadd.f32 %v530, %v661
  %v664 = vtanh.pop %v663
  %v666 = vrot.slane %v664, 1
  %v668 = vsub.f32 %v617, %v666
  %v670 = vrot.slane %v668, 7
  %671 = vrot.lane.b32.xlu0 %v670, 96
  %v672 = vpop.permute.xlu0 %671
  %v674 = vmul.f32 %v651, %v672
  %676 = vrot.lane.b32.xlu0 %v674, 32
  %v677 = vpop.permute.xlu0 %676
  %v679 = vadd.f32 %v664, %v677
  %v681 = vrot.slane %v679, 2
  %682 = vrot.lane.b32.xlu0 %v681, 64
  %v683 = vpop.permute.xlu0 %682
  %v684 = vsel %vm133, %v683, 0
  %686 = vmatpush.msra.mxu0 0.0
  %687 = vmatpush.msra.mxu0 0.0
  %688 = vmatpush.msra.mxu0 0.0
  %689 = vmatpush.msra.mxu0 0.0
  %690 = vmatpush.msra.mxu0 0.0
  %691 = vmatpush.msra.mxu0 0.0
  %692 = vmatpush.msra.mxu0 0.0
  %693 = vmatpush.msra.mxu0 0.0
  %694 = vmatpush.msra.mxu0 0.0
  %695 = vmatpush.msra.mxu0 0.0
  %696 = vmatpush.msra.mxu0 0.0
  %697 = vmatpush.msra.mxu0 0.0
  %698 = vmatpush.msra.mxu0 %v29
  %699 = vmatpush.msra.mxu0 %v28
  %700 = vmatpush.msra.mxu0 %v27
  %701 = vmatpush.msra.mxu0 %v26
  %702 = vmatmul.f32.gmra.mxu0 %v684
  %v703 = vpop.f32.mrf.mxu0
  %v704 = vadd.f32 0.0, %v703
  %705 = vdwg.mxu0
  %v707 = vrot.slane %v704, 5
  %v709 = vadd.f32 %v530, %v707
  %v710 = vmul.f32 %v709, 0.5
  %v711 = vtanh.pop %v710
  %v712 = vmul.f32 %v711, 0.5
  %v713 = vadd.f32 %v712, 0.5
  %v714 = vadd.f32 %v704, %v588
  %v716 = vrot.slane %v714, 5
  %717 = vrot.lane.b32.xlu0 %v716, 64
  %v718 = vpop.permute.xlu0 %717
  %v720 = vmul.f32 %v713, %v718
  %722 = vrot.lane.b32.xlu0 %v720, 64
  %v723 = vpop.permute.xlu0 %722
  %v725 = vadd.f32 %v530, %v723
  %v726 = vtanh.pop %v725
  %v728 = vrot.slane %v726, 1
  %v730 = vsub.f32 %v679, %v728
  %v732 = vrot.slane %v730, 7
  %733 = vrot.lane.b32.xlu0 %v732, 96
  %v734 = vpop.permute.xlu0 %733
  %v736 = vmul.f32 %v713, %v734
  %738 = vrot.lane.b32.xlu0 %v736, 32
  %v739 = vpop.permute.xlu0 %738
  %v741 = vadd.f32 %v726, %v739
  %v743 = vrot.slane %v741, 3
  %744 = vrot.lane.b32.xlu0 %v743, 64
  %v745 = vpop.permute.xlu0 %744
  %v746 = vsel %vm133, %v745, 0
  %748 = vmatpush.msra.mxu0 0.0
  %749 = vmatpush.msra.mxu0 0.0
  %750 = vmatpush.msra.mxu0 0.0
  %751 = vmatpush.msra.mxu0 0.0
  %752 = vmatpush.msra.mxu0 0.0
  %753 = vmatpush.msra.mxu0 0.0
  %754 = vmatpush.msra.mxu0 0.0
  %755 = vmatpush.msra.mxu0 0.0
  %756 = vmatpush.msra.mxu0 0.0
  %757 = vmatpush.msra.mxu0 0.0
  %758 = vmatpush.msra.mxu0 0.0
  %759 = vmatpush.msra.mxu0 0.0
  %760 = vmatpush.msra.mxu0 %v29
  %761 = vmatpush.msra.mxu0 %v28
  %762 = vmatpush.msra.mxu0 %v27
  %763 = vmatpush.msra.mxu0 %v26
  %764 = vmatmul.f32.gmra.mxu0 %v746
  %v765 = vpop.f32.mrf.mxu0
  %v766 = vadd.f32 0.0, %v765
  %767 = vdwg.mxu0
  %v769 = vrot.slane %v766, 4
  %v771 = vadd.f32 %v530, %v769
  %v772 = vmul.f32 %v771, 0.5
  %v773 = vtanh.pop %v772
  %v774 = vmul.f32 %v773, 0.5
  %v775 = vadd.f32 %v774, 0.5
  %v776 = vadd.f32 %v766, %v588
  %v778 = vrot.slane %v776, 4
  %779 = vrot.lane.b32.xlu0 %v778, 64
  %v780 = vpop.permute.xlu0 %779
  %v782 = vmul.f32 %v775, %v780
  %784 = vrot.lane.b32.xlu0 %v782, 64
  %v785 = vpop.permute.xlu0 %784
  %v787 = vadd.f32 %v530, %v785
  %v788 = vtanh.pop %v787
  %v790 = vrot.slane %v788, 1
  %v792 = vsub.f32 %v741, %v790
  %v794 = vrot.slane %v792, 7
  %795 = vrot.lane.b32.xlu0 %v794, 96
  %v796 = vpop.permute.xlu0 %795
  %v798 = vmul.f32 %v775, %v796
  %800 = vrot.lane.b32.xlu0 %v798, 32
  %v801 = vpop.permute.xlu0 %800
  %v803 = vadd.f32 %v788, %v801
  %v805 = vrot.slane %v803, 4
  %806 = vrot.lane.b32.xlu0 %v805, 64
  %v807 = vpop.permute.xlu0 %806
  %v808 = vsel %vm133, %v807, 0
  %810 = vmatpush.msra.mxu0 0.0
  %811 = vmatpush.msra.mxu0 0.0
  %812 = vmatpush.msra.mxu0 0.0
  %813 = vmatpush.msra.mxu0 0.0
  %814 = vmatpush.msra.mxu0 0.0
  %815 = vmatpush.msra.mxu0 0.0
  %816 = vmatpush.msra.mxu0 0.0
  %817 = vmatpush.msra.mxu0 0.0
  %818 = vmatpush.msra.mxu0 0.0
  %819 = vmatpush.msra.mxu0 0.0
  %820 = vmatpush.msra.mxu0 0.0
  %821 = vmatpush.msra.mxu0 0.0
  %822 = vmatpush.msra.mxu0 %v29
  %823 = vmatpush.msra.mxu0 %v28
  %824 = vmatpush.msra.mxu0 %v27
  %825 = vmatpush.msra.mxu0 %v26
  %826 = vmatmul.f32.gmra.mxu0 %v808
  %v827 = vpop.f32.mrf.mxu0
  %v828 = vadd.f32 0.0, %v827
  %829 = vdwg.mxu0
  %v831 = vrot.slane %v828, 3
  %v833 = vadd.f32 %v530, %v831
  %v834 = vmul.f32 %v833, 0.5
  %v835 = vtanh.pop %v834
  %v836 = vmul.f32 %v835, 0.5
  %v837 = vadd.f32 %v836, 0.5
  %v838 = vadd.f32 %v828, %v588
  %v840 = vrot.slane %v838, 3
  %841 = vrot.lane.b32.xlu0 %v840, 64
  %v842 = vpop.permute.xlu0 %841
  %v844 = vmul.f32 %v837, %v842
  %846 = vrot.lane.b32.xlu0 %v844, 64
  %v847 = vpop.permute.xlu0 %846
  %v849 = vadd.f32 %v530, %v847
  %v850 = vtanh.pop %v849
  %v852 = vrot.slane %v850, 1
  %v854 = vsub.f32 %v803, %v852
  %v856 = vrot.slane %v854, 7
  %857 = vrot.lane.b32.xlu0 %v856, 96
  %v858 = vpop.permute.xlu0 %857
  %v860 = vmul.f32 %v837, %v858
  %862 = vrot.lane.b32.xlu0 %v860, 32
  %v863 = vpop.permute.xlu0 %862
  %v865 = vadd.f32 %v850, %v863
  %v867 = vrot.slane %v865, 5
  %868 = vrot.lane.b32.xlu0 %v867, 64
  %v869 = vpop.permute.xlu0 %868
  %v870 = vsel %vm133, %v869, 0
  %872 = vmatpush.msra.mxu0 0.0
  %873 = vmatpush.msra.mxu0 0.0
  %874 = vmatpush.msra.mxu0 0.0
  %875 = vmatpush.msra.mxu0 0.0
  %876 = vmatpush.msra.mxu0 0.0
  %877 = vmatpush.msra.mxu0 0.0
  %878 = vmatpush.msra.mxu0 0.0
  %879 = vmatpush.msra.mxu0 0.0
  %880 = vmatpush.msra.mxu0 0.0
  %881 = vmatpush.msra.mxu0 0.0
  %882 = vmatpush.msra.mxu0 0.0
  %883 = vmatpush.msra.mxu0 0.0
  %884 = vmatpush.msra.mxu0 %v29
  %885 = vmatpush.msra.mxu0 %v28
  %886 = vmatpush.msra.mxu0 %v27
  %887 = vmatpush.msra.mxu0 %v26
  %888 = vmatmul.f32.gmra.mxu0 %v870
  %v889 = vpop.f32.mrf.mxu0
  %v890 = vadd.f32 0.0, %v889
  %891 = vdwg.mxu0
  %v893 = vrot.slane %v890, 2
  %v895 = vadd.f32 %v530, %v893
  %v896 = vmul.f32 %v895, 0.5
  %v897 = vtanh.pop %v896
  %v898 = vmul.f32 %v897, 0.5
  %v899 = vadd.f32 %v898, 0.5
  %v900 = vadd.f32 %v890, %v588
  %v902 = vrot.slane %v900, 2
  %903 = vrot.lane.b32.xlu0 %v902, 64
  %v904 = vpop.permute.xlu0 %903
  %v906 = vmul.f32 %v899, %v904
  %908 = vrot.lane.b32.xlu0 %v906, 64
  %v909 = vpop.permute.xlu0 %908
  %v911 = vadd.f32 %v530, %v909
  %v912 = vtanh.pop %v911
  %v914 = vrot.slane %v912, 1
  %v916 = vsub.f32 %v865, %v914
  %v918 = vrot.slane %v916, 7
  %919 = vrot.lane.b32.xlu0 %v918, 96
  %v920 = vpop.permute.xlu0 %919
  %v922 = vmul.f32 %v899, %v920
  %924 = vrot.lane.b32.xlu0 %v922, 32
  %v925 = vpop.permute.xlu0 %924
  %v927 = vadd.f32 %v912, %v925
  %v929 = vrot.slane %v927, 6
  %930 = vrot.lane.b32.xlu0 %v929, 64
  %v931 = vpop.permute.xlu0 %930
  %v932 = vsel %vm133, %v931, 0
  %934 = vmatpush.msra.mxu0 0.0
  %935 = vmatpush.msra.mxu0 0.0
  %936 = vmatpush.msra.mxu0 0.0
  %937 = vmatpush.msra.mxu0 0.0
  %938 = vmatpush.msra.mxu0 0.0
  %939 = vmatpush.msra.mxu0 0.0
  %940 = vmatpush.msra.mxu0 0.0
  %941 = vmatpush.msra.mxu0 0.0
  %942 = vmatpush.msra.mxu0 0.0
  %943 = vmatpush.msra.mxu0 0.0
  %944 = vmatpush.msra.mxu0 0.0
  %945 = vmatpush.msra.mxu0 0.0
  %946 = vmatpush.msra.mxu0 %v29
  %947 = vmatpush.msra.mxu0 %v28
  %948 = vmatpush.msra.mxu0 %v27
  %949 = vmatpush.msra.mxu0 %v26
  %950 = vmatmul.f32.gmra.mxu0 %v932
  %v951 = vpop.f32.mrf.mxu0
  %v952 = vadd.f32 0.0, %v951
  %953 = vdwg.mxu0
  %v955 = vrot.slane %v952, 1
  %v957 = vadd.f32 %v530, %v955
  %v958 = vmul.f32 %v957, 0.5
  %v959 = vtanh.pop %v958
  %v960 = vmul.f32 %v959, 0.5
  %v961 = vadd.f32 %v960, 0.5
  %v962 = vadd.f32 %v952, %v588
  %v964 = vrot.slane %v962, 1
  %965 = vrot.lane.b32.xlu0 %v964, 64
  %v966 = vpop.permute.xlu0 %965
  %v968 = vmul.f32 %v961, %v966
  %970 = vrot.lane.b32.xlu0 %v968, 64
  %v971 = vpop.permute.xlu0 %970
  %v973 = vadd.f32 %v530, %v971
  %v974 = vtanh.pop %v973
  %v976 = vrot.slane %v974, 1
  %v978 = vsub.f32 %v927, %v976
  %v980 = vrot.slane %v978, 7
  %981 = vrot.lane.b32.xlu0 %v980, 96
  %v982 = vpop.permute.xlu0 %981
  %v984 = vmul.f32 %v961, %v982
  %986 = vrot.lane.b32.xlu0 %v984, 32
  %v987 = vpop.permute.xlu0 %986
  %v989 = vadd.f32 %v974, %v987
  %v991 = vrot.slane %v989, 7
  %992 = vrot.lane.b32.xlu0 %v991, 64
  %v993 = vpop.permute.xlu0 %992
  %v994 = vrot.slane %v17, 4
  %v996 = vsel %vm133, %v993, 0
  %998 = vmatpush.msra.mxu0 0.0
  %999 = vmatpush.msra.mxu0 0.0
  %1000 = vmatpush.msra.mxu0 0.0
  %1001 = vmatpush.msra.mxu0 0.0
  %1002 = vmatpush.msra.mxu0 0.0
  %1003 = vmatpush.msra.mxu0 0.0
  %1004 = vmatpush.msra.mxu0 0.0
  %1005 = vmatpush.msra.mxu0 0.0
  %1006 = vmatpush.msra.mxu0 0.0
  %1007 = vmatpush.msra.mxu0 0.0
  %1008 = vmatpush.msra.mxu0 0.0
  %1009 = vmatpush.msra.mxu0 0.0
  %1010 = vmatpush.msra.mxu0 %v37
  %1011 = vmatpush.msra.mxu0 %v36
  %1012 = vmatpush.msra.mxu0 %v35
  %1013 = vmatpush.msra.mxu0 %v34
  %1014 = vmatmul.f32.gmra.mxu0 %v996
  %v1015 = vpop.f32.mrf.mxu0
  %v1016 = vadd.f32 %v994, %v1015
  %1017 = vdwg.mxu0
  %v1018 = vperm.slane %v1016, 0
  %1019 = vmatpush.msra.mxu0 0.0
  %1020 = vmatpush.msra.mxu0 0.0
  %1021 = vmatpush.msra.mxu0 0.0
  %1022 = vmatpush.msra.mxu0 0.0
  %1023 = vmatpush.msra.mxu0 0.0
  %1024 = vmatpush.msra.mxu0 0.0
  %1025 = vmatpush.msra.mxu0 0.0
  %1026 = vmatpush.msra.mxu0 0.0
  %1027 = vmatpush.msra.mxu0 0.0
  %1028 = vmatpush.msra.mxu0 0.0
  %1029 = vmatpush.msra.mxu0 0.0
  %1030 = vmatpush.msra.mxu0 0.0
  %1031 = vmatpush.msra.mxu0 %v33
  %1032 = vmatpush.msra.mxu0 %v32
  %1033 = vmatpush.msra.mxu0 %v31
  %1034 = vmatpush.msra.mxu0 %v30
  %1035 = vmatmul.f32.gmra.mxu0 %v510
  %v1036 = vpop.f32.mrf.mxu0
  %v1037 = vadd.f32 %v1018, %v1036
  %1038 = vdwg.mxu0
  %v1039 = vmax.f32 %v1037, 0.0
  %v1040 = vperm.slane %v17, 5
  %vm1041 = vcmask 523264
  %v1043 = vsel %vm1041, %v1039, 0
  %1045 = vmatpush.msra.mxu0 0.0
  %1046 = vmatpush.msra.mxu0 0.0
  %1047 = vmatpush.msra.mxu0 0.0
  %1048 = vmatpush.msra.mxu0 0.0
  %1049 = vmatpush.msra.mxu0 0.0
  %1050 = vmatpush.msra.mxu0 0.0
  %1051 = vmatpush.msra.mxu0 0.0
  %1052 = vmatpush.msra.mxu0 0.0
  %1053 = vmatpush.msra.mxu0 %v45
  %1054 = vmatpush.msra.mxu0 %v44
  %1055 = vmatpush.msra.mxu0 %v43
  %1056 = vmatpush.msra.mxu0 %v42
  %1057 = vmatpush.msra.mxu0 %v41
  %1058 = vmatpush.msra.mxu0 %v40
  %1059 = vmatpush.msra.mxu0 %v39
  %1060 = vmatpush.msra.mxu0 %v38
  %1061 = vmatmul.f32.gmra.mxu0 %v1043
  %v1062 = vpop.f32.mrf.mxu0
  %v1063 = vadd.f32 %v1040, %v1062
  %1064 = vdwg.mxu0
  %v1065 = vmax.f32 %v1063, 0.0
  %v1066 = vperm.slane %v17, 6
  %v1067 = vmul.f32 %v1065, %v1066
  %v1068 = vsel %vm1041, %v1067, 0.0
  %1069 = vadd.xlane.f32.xlu0 %v1068
  %v1070 = vpop.xlane.xlu0 %1069
  %v1071 = vperm.slane %v17, 7
  %v1072 = vadd.f32 %v1070, %v1071
  %vm1073 = vcmask 7168
  %v1074 = vsel %vm1073, %v1072, -inf
  %v1075 = vrot.slane %v1074, 4
  %v1076 = vmax.f32 %v1074, %v1075
  %v1077 = vrot.slane %v1076, 2
  %v1078 = vmax.f32 %v1076, %v1077
  %v1079 = vrot.slane %v1078, 1
  %v1080 = vmax.f32 %v1078, %v1079
  %v1081 = vsub.f32 %v1072, %v1080
  %v1082 = vmul.f32 %v1081, 1.442695
  %v1083 = vpow.pop %v1082
  %v1084 = vsel %vm1073, %v1083, 0.0
  %v1085 = vrot.slane %v1084, 4
  %v1086 = vadd.f32 %v1084, %v1085
  %v1087 = vrot.slane %v1086, 2
  %v1088 = vadd.f32 %v1086, %v1087
  %v1089 = vrot.slane %v1088, 1
  %v1090 = vadd.f32 %v1088, %v1089
  %v1091 = vrcp.pop %v1090
  %v1092 = vmul.f32 %v1090, %v1091
  %v1093 = vsub.f32 1.0, %v1092
  %v1094 = vmul.f32 %v1091, %v1093
  %v1095 = vadd.f32 %v1091, %v1094
  %vm1096 = vweird.f32 %v1090
  %vm1097 = vweird.f32 %v1091
  %vm1098 = vmor %vm1096, %vm1097
  %v1099 = vsel %vm1098, %v1091, %v1095
  %v1100 = vand.u32 2147483647, %v1090
  %vm1101 = vcmp.eq.f32.partialorder %v1100, 8.507059e+37
  %v1102 = vand.u32 %v1090, 2147483648
  %v1103 = vor.u32 1.1754944e-38, %v1102
  %v1104 = vsel %vm1101, %v1103, %v1099
  %v1105 = vmul.f32 %v1083, %v1104
  %1106 = vst.msk [vmem:[%s4] sm:$0xff] %vm1073, %v1105
  // Predicated region
  $region18: #{meta_solver_forward.1} parent=0 // pred_check
    _
  $region19: #{meta_solver_forward.1} parent=0 // pred_check_branch
    %1108 = sbr.rel (0) target = $region21
  $region20: #{meta_solver_forward.1} parent=0 // pred_region
    _
  $region21: #{meta_solver_forward.1} parent=0 // pred_fallthru
    _
  // Predicated region
  $region22: #{meta_solver_forward.1} parent=0 // pred_check
    _
  $region23: #{meta_solver_forward.1} parent=0 // pred_check_branch
    %1110 = sbr.rel (0) target = $region25
  $region24: #{meta_solver_forward.1} parent=0 // pred_region
    _
  $region25: #{meta_solver_forward.1} parent=0 // pred_fallthru
    _

</llo_original>
